<compile_context>
chip_gen: v6e
topology: v6e:2x2x1
jax: 0.10.0
libtpu: 0.0.40
codegen_flags: <defaults>
</compile_context>

<pallas_src>
import math
import jax
import jax.numpy as jnp
from jax.experimental import pallas as pl
from jax.experimental.pallas import tpu as pltpu

# ----------------------------- configuration --------------------------------
N          = 16   # number of nodes
F_IN       = 32   # input feature dim
F_OUT      = 16   # total output feature dim (across heads)
HEADS      = 2    # head_number
METAPATHS  = 2    # metapath_number
ALPHA      = 0.2  # LeakyReLU negative slope
DROPOUT    = 0.5  # inactive (eval mode)
FH         = F_OUT // HEADS          # per-head output dim
ADDITION   = FH                      # adition_tag (must equal FH for Z@trans3)
PH         = METAPATHS * HEADS       # total number of (metapath, head) pairs
NEG_INF    = -1e15                   # masked_fill value from the reference

# packed-parameter row offsets (static, used inside the kernel)
R1 = F_IN            # rows [0 , R1) : trans1            (F_IN, FH) per head
R2 = R1 + FH         # rows [R1, R2) : trans2/trans3     (FH,  FH) per head
R3 = R2 + FH         # rows [R2, R3) : a_l in column 0   (FH,  FH) per head
ROWS = R3 + FH       # rows [R3, ..) : a_r in row 0      (FH,  FH) per head

assert ADDITION == FH, "adition_tag must equal per-head output dim for Z @ trans3"


# ------------------------------- kernel -------------------------------------
def node_attention_kernel(x_ref, bias_ref, params_ref, o_ref):
    """All METAPATHS*HEADS heads in one invocation, head-major batched layout."""
    x    = x_ref[...]                              # (N, F_IN)
    bias = bias_ref[...]                           # (PH, N, N)  0 / -1e15 additive mask
    w1   = params_ref[:, 0:R1, :]                  # (PH, F_IN, FH)   trans1
    w2   = params_ref[:, R1:R2, :]                 # (PH, FH,   FH)   trans2/trans3
    a_l  = params_ref[:, R2:R3, 0:1]               # (PH, FH, 1)      attention[:FH]
    a_r  = params_ref[:, R3:R3 + 1, :]             # (PH, 1,  FH)     attention[FH:]

    def attend(h):
        # h: (PH, N, FH) — one batched attention round for every head at once.
        e1 = jnp.einsum('gnf,gfo->gno', h, a_l,
                        preferred_element_type=jnp.float32)       # (PH, N, 1)
        e2 = jnp.einsum('gof,gnf->gon', a_r, h,
                        preferred_element_type=jnp.float32)       # (PH, 1, N)
        s = e1 + e2                                               # (PH, N, N)
        s = jnp.maximum(s, ALPHA * s) + bias                      # LeakyReLU + mask bias
        m = jnp.max(s, axis=2, keepdims=True)                     # row max   (PH, N, 1)
        p = jnp.exp(s - m)
        attn = p * (1.0 / jnp.sum(p, axis=2, keepdims=True))      # exact softmax
        return jnp.einsum('gij,gjf->gif', attn, h,
                          preferred_element_type=jnp.float32)     # (PH, N, FH)

    xb = jnp.broadcast_to(x[None, :, :], (PH, N, F_IN))           # cheap leading-dim bcast
    h  = jnp.einsum('gnf,gfo->gno', xb, w1,
                    preferred_element_type=jnp.float32)           # x @ trans1 (all heads)
    z  = attend(h)                                                # round 1
    h2 = jnp.einsum('gnf,gfo->gno', z, w2,
                    preferred_element_type=jnp.float32)           # Z @ trans{2,3}
    out = attend(h2)                                              # round 2
    o_ref[...] = jax.nn.sigmoid(out).astype(o_ref.dtype)          # final sigmoid


# ------------------------------- wrapper -------------------------------------
def node_attention(x, masks, w1, w2, w3, att):
    """
    x     : (N, F_IN)
    masks : (P, N, N)                adjacency per metapath
    w1    : (P*H, F_IN, FH)          trans1 per (metapath, head)
    w2    : (P*H, FH,   FH)          trans2 per (metapath, head)
    w3    : (P*H, ADDITION, FH)      trans3 per (metapath, head)
    att   : (P*H, 2*FH, 1)           attention vector per (metapath, head)
    returns (P, N, F_OUT)
    """
    n = x.shape[0]
    # static branch from the reference: if Z.shape[0] == 3025 -> trans2 else trans3
    w_second = w2 if n == 3025 else w3

    # ---- parameter packing (layout plumbing, outside the kernel) ----
    # One (PH, ROWS, FH) buffer -> a single input DMA; sliced in-kernel at
    # static (sublane-aligned) row offsets.
    a_l_blk = jnp.zeros((PH, FH, FH), jnp.float32).at[:, :, 0].set(att[:, :FH, 0])
    a_r_blk = jnp.zeros((PH, FH, FH), jnp.float32).at[:, 0, :].set(att[:, FH:, 0])
    params = jnp.concatenate(
        [w1.astype(jnp.float32), w_second.astype(jnp.float32), a_l_blk, a_r_blk],
        axis=1)                                                     # (PH, 56, FH)

    # Additive mask bias, replicated per head so the kernel never indexes heads.
    bias = jnp.where(masks == 0, NEG_INF, 0.0).astype(jnp.float32)  # (P, N, N)
    bias = jnp.repeat(bias, HEADS, axis=0)                          # (PH, N, N)

    out = pl.pallas_call(
        node_attention_kernel,
        out_shape=jax.ShapeDtypeStruct((PH, n, FH), jnp.float32),
        # Single invocation: every operand is a full-array VMEM block, loaded once.
        in_specs=[pl.BlockSpec(memory_space=pltpu.MemorySpace.VMEM)] * 3,
        out_specs=pl.BlockSpec(memory_space=pltpu.MemorySpace.VMEM),
    )(x, bias, params)

    # (PH, N, FH) -> (P, H, N, FH) -> (P, N, H, FH) -> (P, N, F_OUT)
    out = out.reshape(METAPATHS, HEADS, n, FH).transpose(0, 2, 1, 3)
    return out.reshape(METAPATHS, n, HEADS * FH)


# --------------------------- parameter init ----------------------------------
def xavier_uniform(key, shape, gain=1.414):
    fan_in, fan_out = shape[-2], shape[-1]
    a = gain * math.sqrt(6.0 / (fan_in + fan_out))
    return jax.random.uniform(key, shape, jnp.float32, minval=-a, maxval=a)


def init_params(key):
    k1, k2, k3, k4 = jax.random.split(key, 4)
    w1  = xavier_uniform(k1, (PH, F_IN, FH))
    w2  = xavier_uniform(k2, (PH, FH, FH))
    # NOTE: the torch reference never actually initializes trans3 (it re-inits
    # trans2); we initialize it deterministically here instead.
    w3  = xavier_uniform(k3, (PH, ADDITION, FH))
    att = xavier_uniform(k4, (PH, 2 * FH, 1))
    return w1, w2, w3, att


# ------------------------------ reference ------------------------------------
def node_attention_ref(x, masks, w1, w2, w3, att):
    """Pure-JAX reference mirroring the PyTorch forward (eval mode).

    Matmuls run at Precision.HIGHEST so the baseline is true f32 (the XLA
    default on TPU is single-pass bf16, which would itself be ~1e-3 off).
    """
    hp = jax.lax.Precision.HIGHEST
    n = x.shape[0]
    w_second = w2 if n == 3025 else w3
    per_metapath = []
    for p in range(METAPATHS):
        heads = []
        for h in range(HEADS):
            g = p * HEADS + h
            mask = masks[p]

            def attend(hh):
                e1 = jnp.dot(hh, att[g, :FH, :], precision=hp)
                e2 = jnp.dot(hh, att[g, FH:, :], precision=hp)
                s = e1 + e2.T
                s = jnp.where(s > 0, s, ALPHA * s)
                s = jnp.where(mask == 0, NEG_INF, s)
                a = jax.nn.softmax(s, axis=1)
                return jnp.dot(a, hh, precision=hp)

            hx = jnp.dot(x, w1[g], precision=hp)
            z = attend(hx)
            h2 = jnp.dot(z, w_second[g], precision=hp)
            heads.append(attend(h2))
        per_metapath.append(jnp.concatenate(heads, axis=1))
    return jax.nn.sigmoid(jnp.stack(per_metapath))


# -------------------------------- main ---------------------------------------
if __name__ == "__main__":
    key = jax.random.PRNGKey(0)
    kx, km, kp = jax.random.split(key, 3)

    x = jax.random.normal(kx, (N, F_IN), jnp.float32)
    # random binary adjacency per metapath with self loops
    masks = (jax.random.uniform(km, (METAPATHS, N, N)) > 0.5).astype(jnp.float32)
    masks = jnp.maximum(masks, jnp.eye(N, dtype=jnp.float32)[None])

    w1, w2, w3, att = init_params(kp)

    out = node_attention(x, masks, w1, w2, w3, att)
    out = jax.block_until_ready(out)

    ref = node_attention_ref(x, masks, w1, w2, w3, att)
    assert out.shape == (METAPATHS, N, F_OUT), out.shape

    # Softmax now uses an exact division (approx reciprocal removed, the rev-2
    # failure source).  Remaining difference vs the HIGHEST-precision reference
    # is MXU multiply-pass rounding through two attention rounds; structural
    # bugs (wrong mask/head/weight wiring) produce >= 1e-1 post-sigmoid.
    err = float(jnp.max(jnp.abs(out - ref)))
    assert err < 5e-3, err

    print("KERNEL_OK")
</pallas_src>

<mosaic_0001>
module attributes {stable_mosaic.version = 11 : i64} {
  func.func @node_attention_kernel(%arg0: memref<16x32xf32, #tpu.memory_space<vmem>>, %arg1: memref<4x16x16xf32, #tpu.memory_space<vmem>>, %arg2: memref<4x56x8xf32, #tpu.memory_space<vmem>>, %arg3: memref<4x16x8xf32, #tpu.memory_space<vmem>>) attributes {dimension_semantics = [], scalar_prefetch = 0 : i64, scratch_operands = 0 : i64, tpu.core_type = #tpu.core_type<tc>} {
    %c0 = arith.constant 0 : index
    %c0_0 = arith.constant 0 : index
    %0 = vector.load %arg0[%c0, %c0_0] : memref<16x32xf32, #tpu.memory_space<vmem>>, vector<16x32xf32>
    %c0_1 = arith.constant 0 : index
    %c0_2 = arith.constant 0 : index
    %c0_3 = arith.constant 0 : index
    %1 = vector.load %arg1[%c0_1, %c0_2, %c0_3] : memref<4x16x16xf32, #tpu.memory_space<vmem>>, vector<4x16x16xf32>
    %c0_4 = arith.constant 0 : index
    %c0_5 = arith.constant 0 : index
    %c0_6 = arith.constant 0 : index
    %2 = vector.load %arg2[%c0_4, %c0_5, %c0_6] : memref<4x56x8xf32, #tpu.memory_space<vmem>>, vector<4x32x8xf32>
    %c0_7 = arith.constant 0 : index
    %c32 = arith.constant 32 : index
    %c0_8 = arith.constant 0 : index
    %3 = vector.load %arg2[%c0_7, %c32, %c0_8] : memref<4x56x8xf32, #tpu.memory_space<vmem>>, vector<4x8x8xf32>
    %c0_9 = arith.constant 0 : index
    %c40 = arith.constant 40 : index
    %c0_10 = arith.constant 0 : index
    %4 = vector.load %arg2[%c0_9, %c40, %c0_10] : memref<4x56x8xf32, #tpu.memory_space<vmem>>, vector<4x8x1xf32>
    %c0_11 = arith.constant 0 : index
    %c48 = arith.constant 48 : index
    %c0_12 = arith.constant 0 : index
    %5 = vector.load %arg2[%c0_11, %c48, %c0_12] : memref<4x56x8xf32, #tpu.memory_space<vmem>>, vector<4x1x8xf32>
    %6 = vector.shape_cast %0 : vector<16x32xf32> to vector<1x16x32xf32>
    %7 = vector.shape_cast %6 : vector<1x16x32xf32> to vector<1x16x32xf32>
    %8 = vector.broadcast %7 : vector<1x16x32xf32> to vector<4x16x32xf32>
    "tpu.trace_start"() <{level = 10 : i32, message = "gnf,gfo->gno"}> : () -> ()
    %cst = arith.constant dense<0.000000e+00> : vector<4x16x8xf32>
    %9 = tpu.matmul %8, %2, %cst {dimension_numbers = #tpu.dot_dimension_numbers<[2], [1], [1], [2], [0, 0, 0, 1, 1, 2], [0], [0]>} : vector<4x16x32xf32>, vector<4x32x8xf32>, vector<4x16x8xf32> -> vector<4x16x8xf32>
    %cst_13 = arith.constant dense<0.000000e+00> : vector<4x16x1xf32>
    %10 = tpu.matmul %9, %4, %cst_13 {dimension_numbers = #tpu.dot_dimension_numbers<[2], [1], [1], [2], [0, 0, 0, 1, 1, 2], [0], [0]>} : vector<4x16x8xf32>, vector<4x8x1xf32>, vector<4x16x1xf32> -> vector<4x16x1xf32>
    "tpu.trace_stop"() : () -> ()
    "tpu.trace_start"() <{level = 10 : i32, message = "gof,gnf->gon"}> : () -> ()
    %cst_14 = arith.constant dense<0.000000e+00> : vector<4x1x16xf32>
    %11 = tpu.matmul %5, %9, %cst_14 {dimension_numbers = #tpu.dot_dimension_numbers<[2], [2], [1], [1], [0, 0, 0, 1, 1, 1], [0], [0]>} : vector<4x1x8xf32>, vector<4x16x8xf32>, vector<4x1x16xf32> -> vector<4x1x16xf32>
    "tpu.trace_stop"() : () -> ()
    %12 = vector.broadcast %10 : vector<4x16x1xf32> to vector<4x16x16xf32>
    %13 = vector.broadcast %11 : vector<4x1x16xf32> to vector<4x16x16xf32>
    %14 = arith.addf %12, %13 : vector<4x16x16xf32>
    %cst_15 = arith.constant 2.000000e-01 : f32
    %15 = vector.broadcast %cst_15 : f32 to vector<4x16x16xf32>
    %16 = arith.mulf %15, %14 : vector<4x16x16xf32>
    %17 = arith.maximumf %14, %16 : vector<4x16x16xf32>
    %18 = arith.addf %17, %1 : vector<4x16x16xf32>
    %cst_16 = arith.constant dense<0xFF800000> : vector<4x16xf32>
    %19 = vector.multi_reduction <maximumf>, %18, %cst_16 [2] : vector<4x16x16xf32> to vector<4x16xf32>
    %20 = vector.shape_cast %19 : vector<4x16xf32> to vector<4x16x1xf32>
    %21 = vector.broadcast %20 : vector<4x16x1xf32> to vector<4x16x16xf32>
    %22 = arith.subf %18, %21 : vector<4x16x16xf32>
    %23 = math.exp %22 : vector<4x16x16xf32>
    %cst_17 = arith.constant dense<0.000000e+00> : vector<4x16xf32>
    %24 = vector.multi_reduction <add>, %23, %cst_17 [2] : vector<4x16x16xf32> to vector<4x16xf32>
    %25 = vector.shape_cast %24 : vector<4x16xf32> to vector<4x16x1xf32>
    %cst_18 = arith.constant 1.000000e+00 : f32
    %26 = vector.broadcast %cst_18 : f32 to vector<4x16x1xf32>
    %27 = arith.divf %26, %25 : vector<4x16x1xf32>
    %28 = vector.broadcast %27 : vector<4x16x1xf32> to vector<4x16x16xf32>
    %29 = arith.mulf %23, %28 : vector<4x16x16xf32>
    "tpu.trace_start"() <{level = 10 : i32, message = "gij,gjf->gif"}> : () -> ()
    %cst_19 = arith.constant dense<0.000000e+00> : vector<4x16x8xf32>
    %30 = tpu.matmul %29, %9, %cst_19 {dimension_numbers = #tpu.dot_dimension_numbers<[2], [1], [1], [2], [0, 0, 0, 1, 1, 2], [0], [0]>} : vector<4x16x16xf32>, vector<4x16x8xf32>, vector<4x16x8xf32> -> vector<4x16x8xf32>
    "tpu.trace_stop"() : () -> ()
    "tpu.trace_start"() <{level = 10 : i32, message = "gnf,gfo->gno"}> : () -> ()
    %cst_20 = arith.constant dense<0.000000e+00> : vector<4x16x8xf32>
    %31 = tpu.matmul %30, %3, %cst_20 {dimension_numbers = #tpu.dot_dimension_numbers<[2], [1], [1], [2], [0, 0, 0, 1, 1, 2], [0], [0]>} : vector<4x16x8xf32>, vector<4x8x8xf32>, vector<4x16x8xf32> -> vector<4x16x8xf32>
    %cst_21 = arith.constant dense<0.000000e+00> : vector<4x16x1xf32>
    %32 = tpu.matmul %31, %4, %cst_21 {dimension_numbers = #tpu.dot_dimension_numbers<[2], [1], [1], [2], [0, 0, 0, 1, 1, 2], [0], [0]>} : vector<4x16x8xf32>, vector<4x8x1xf32>, vector<4x16x1xf32> -> vector<4x16x1xf32>
    "tpu.trace_stop"() : () -> ()
    "tpu.trace_start"() <{level = 10 : i32, message = "gof,gnf->gon"}> : () -> ()
    %cst_22 = arith.constant dense<0.000000e+00> : vector<4x1x16xf32>
    %33 = tpu.matmul %5, %31, %cst_22 {dimension_numbers = #tpu.dot_dimension_numbers<[2], [2], [1], [1], [0, 0, 0, 1, 1, 1], [0], [0]>} : vector<4x1x8xf32>, vector<4x16x8xf32>, vector<4x1x16xf32> -> vector<4x1x16xf32>
    "tpu.trace_stop"() : () -> ()
    %34 = vector.broadcast %32 : vector<4x16x1xf32> to vector<4x16x16xf32>
    %35 = vector.broadcast %33 : vector<4x1x16xf32> to vector<4x16x16xf32>
    %36 = arith.addf %34, %35 : vector<4x16x16xf32>
    %cst_23 = arith.constant 2.000000e-01 : f32
    %37 = vector.broadcast %cst_23 : f32 to vector<4x16x16xf32>
    %38 = arith.mulf %37, %36 : vector<4x16x16xf32>
    %39 = arith.maximumf %36, %38 : vector<4x16x16xf32>
    %40 = arith.addf %39, %1 : vector<4x16x16xf32>
    %cst_24 = arith.constant dense<0xFF800000> : vector<4x16xf32>
    %41 = vector.multi_reduction <maximumf>, %40, %cst_24 [2] : vector<4x16x16xf32> to vector<4x16xf32>
    %42 = vector.shape_cast %41 : vector<4x16xf32> to vector<4x16x1xf32>
    %43 = vector.broadcast %42 : vector<4x16x1xf32> to vector<4x16x16xf32>
    %44 = arith.subf %40, %43 : vector<4x16x16xf32>
    %45 = math.exp %44 : vector<4x16x16xf32>
    %cst_25 = arith.constant dense<0.000000e+00> : vector<4x16xf32>
    %46 = vector.multi_reduction <add>, %45, %cst_25 [2] : vector<4x16x16xf32> to vector<4x16xf32>
    %47 = vector.shape_cast %46 : vector<4x16xf32> to vector<4x16x1xf32>
    %cst_26 = arith.constant 1.000000e+00 : f32
    %48 = vector.broadcast %cst_26 : f32 to vector<4x16x1xf32>
    %49 = arith.divf %48, %47 : vector<4x16x1xf32>
    %50 = vector.broadcast %49 : vector<4x16x1xf32> to vector<4x16x16xf32>
    %51 = arith.mulf %45, %50 : vector<4x16x16xf32>
    "tpu.trace_start"() <{level = 10 : i32, message = "gij,gjf->gif"}> : () -> ()
    %cst_27 = arith.constant dense<0.000000e+00> : vector<4x16x8xf32>
    %52 = tpu.matmul %51, %31, %cst_27 {dimension_numbers = #tpu.dot_dimension_numbers<[2], [1], [1], [2], [0, 0, 0, 1, 1, 2], [0], [0]>} : vector<4x16x16xf32>, vector<4x16x8xf32>, vector<4x16x8xf32> -> vector<4x16x8xf32>
    "tpu.trace_stop"() : () -> ()
    %53 = arith.negf %52 : vector<4x16x8xf32>
    %54 = math.exp %53 : vector<4x16x8xf32>
    %cst_28 = arith.constant 1.000000e+00 : f32
    %55 = vector.broadcast %cst_28 : f32 to vector<4x16x8xf32>
    %56 = arith.addf %55, %54 : vector<4x16x8xf32>
    %57 = arith.divf %55, %56 : vector<4x16x8xf32>
    %c0_29 = arith.constant 0 : index
    %c0_30 = arith.constant 0 : index
    %c0_31 = arith.constant 0 : index
    %58 = vector.load %arg3[%c0_29, %c0_30, %c0_31] : memref<4x16x8xf32, #tpu.memory_space<vmem>>, vector<4x16x8xf32>
    tpu.vector_store %arg3[%c0_29, %c0_30, %c0_31], %57 {strides = array<i32>} : memref<4x16x8xf32, #tpu.memory_space<vmem>>, vector<4x16x8xf32>,
    return
  }
}

</mosaic_0001>

<llo_original>
// kernel: tpu_custom_call.1
$region0: #{tpu_custom_call.1}
  #allocation0 [shape = 'u32[]', space=smem, size = 0x4, offset = 0x4, fixed_abs, tag = 'smem constant byte address 0x4 - core index']
  #allocation1 [shape = 'u32[144,128]{1,0:T(1,128)}', space=vmem, size = 0x12000, scoped, tag = 'internal scratch']
  %s0 = inlined_call_operand.vmem [shape: f32[16,32], index: 0, kind: input, shape index: {}]
  %s1 = inlined_call_operand.vmem [shape: f32[4,16,16], index: 1, kind: input, shape index: {}]
  %s2 = inlined_call_operand.vmem [shape: f32[4,56,8], index: 2, kind: input, shape index: {}]
  %s3 = inlined_call_operand.vmem [shape: f32[4,16,8], index: 3, kind: output, shape index: {}]
  %s4 = sld [smem:[#allocation0]]
  $region22: #{tpu_custom_call.1} parent=0
    _
  %s6 = ssub.s32 1, %s4
  %s7 = scalar_select 0, %s6, %s4
  // Predicated region
  $region2: #{tpu_custom_call.1} parent=0 // pred_check
    _
  $region3: #{tpu_custom_call.1} parent=0 // pred_check_branch
    %9 = sbr.rel (0) target = $region5
  $region4: #{tpu_custom_call.1} parent=0 // pred_region
    _
  $region5: #{tpu_custom_call.1} parent=0 // pred_fallthru
    _
  // Predicated region
  $region6: #{tpu_custom_call.1} parent=0 // pred_check
    _
  $region7: #{tpu_custom_call.1} parent=0 // pred_check_branch
    %11 = sbr.rel (0) target = $region9
  $region8: #{tpu_custom_call.1} parent=0 // pred_region
    _
  $region9: #{tpu_custom_call.1} parent=0 // pred_fallthru
    _
  // Predicated region
  $region10: #{tpu_custom_call.1} parent=0 // pred_check
    _
  $region11: #{tpu_custom_call.1} parent=0 // pred_check_branch
    %13 = sbr.rel (0) target = $region13
  $region12: #{tpu_custom_call.1} parent=0 // pred_region
    _
  $region13: #{tpu_custom_call.1} parent=0 // pred_fallthru
    _
  %v14 = vld [vmem:[%s0] sm:$0xff]
  %v15 = vld [vmem:[%s0 + $0x8] sm:$0xff]
  %v16 = vld [vmem:[%s1] sm:$0xff]
  %v17 = vld [vmem:[%s1 + $0x8] sm:$0xff]
  %v18 = vld [vmem:[%s1 + $0x10] sm:$0xff]
  %v19 = vld [vmem:[%s1 + $0x18] sm:$0xff]
  %v20 = vld [vmem:[%s1 + $0x20] sm:$0xff]
  %v21 = vld [vmem:[%s1 + $0x28] sm:$0xff]
  %v22 = vld [vmem:[%s1 + $0x30] sm:$0xff]
  %v23 = vld [vmem:[%s1 + $0x38] sm:$0xff]
  %v24 = vld [vmem:[%s2] sm:$0xff]
  %v25 = vld [vmem:[%s2 + $0x8] sm:$0xff]
  %v26 = vld [vmem:[%s2 + $0x10] sm:$0xff]
  %v27 = vld [vmem:[%s2 + $0x18] sm:$0xff]
  %v28 = vld [vmem:[%s2 + $0x38] sm:$0xff]
  %v29 = vld [vmem:[%s2 + $0x40] sm:$0xff]
  %v30 = vld [vmem:[%s2 + $0x48] sm:$0xff]
  %v31 = vld [vmem:[%s2 + $0x50] sm:$0xff]
  %v32 = vld [vmem:[%s2 + $0x70] sm:$0xff]
  %v33 = vld [vmem:[%s2 + $0x78] sm:$0xff]
  %v34 = vld [vmem:[%s2 + $0x80] sm:$0xff]
  %v35 = vld [vmem:[%s2 + $0x88] sm:$0xff]
  %v36 = vld [vmem:[%s2 + $0xa8] sm:$0xff]
  %v37 = vld [vmem:[%s2 + $0xb0] sm:$0xff]
  %v38 = vld [vmem:[%s2 + $0xb8] sm:$0xff]
  %v39 = vld [vmem:[%s2 + $0xc0] sm:$0xff]
  %v40 = vld [vmem:[%s2 + $0x20] sm:$0xff]
  %v41 = vld [vmem:[%s2 + $0x58] sm:$0xff]
  %v42 = vld [vmem:[%s2 + $0x90] sm:$0xff]
  %v43 = vld [vmem:[%s2 + $0xc8] sm:$0xff]
  %v44 = vld [vmem:[%s2 + $0x28] sm:$0xff]
  %v45 = vld [vmem:[%s2 + $0x60] sm:$0xff]
  %v46 = vld [vmem:[%s2 + $0x98] sm:$0xff]
  %v47 = vld [vmem:[%s2 + $0xd0] sm:$0xff]
  %v48 = vld [vmem:[%s2 + $0x30] sm:$0x1]
  %v49 = vld [vmem:[%s2 + $0x68] sm:$0x1]
  %v50 = vld [vmem:[%s2 + $0xa0] sm:$0x1]
  %v51 = vld [vmem:[%s2 + $0xd8] sm:$0x1]
  %vm52 = vcmask 261120
  %v54 = vsel %vm52, %v14, 0
  %v57 = vsel %vm52, %v15, 0
  %59 = vmatprep.subr.mxu0 0.0
  %60 = vmatpush1.msra.mxu0 0.0
  %61 = vmatprep.subr.mxu0 0.0
  %62 = vmatpush1.msra.mxu0 0.0
  %63 = vmatprep.subr.mxu0 0.0
  %64 = vmatpush1.msra.mxu0 0.0
  %65 = vmatprep.subr.mxu0 0.0
  %66 = vmatpush1.msra.mxu0 0.0
  %67 = vmatprep.subr.mxu0 0.0
  %68 = vmatpush1.msra.mxu0 0.0
  %69 = vmatprep.subr.mxu0 0.0
  %70 = vmatpush1.msra.mxu0 0.0
  %71 = vmatprep.subr.mxu0 0.0
  %72 = vmatpush1.msra.mxu0 0.0
  %73 = vmatprep.subr.mxu0 0.0
  %74 = vmatpush1.msra.mxu0 0.0
  %75 = vmatprep.subr.mxu0 0.0
  %76 = vmatpush1.msra.mxu0 0.0
  %77 = vmatprep.subr.mxu0 0.0
  %78 = vmatpush1.msra.mxu0 0.0
  %79 = vmatprep.subr.mxu0 0.0
  %80 = vmatpush1.msra.mxu0 0.0
  %81 = vmatprep.subr.mxu0 0.0
  %82 = vmatpush1.msra.mxu0 0.0
  %83 = vmatprep.subr.mxu0 0.0
  %84 = vmatpush1.msra.mxu0 %v27
  %85 = vmatprep.subr.mxu0 0.0
  %86 = vmatpush1.msra.mxu0 %v26
  %87 = vmatprep.subr.mxu0 0.0
  %88 = vmatpush1.msra.mxu0 %v25
  %89 = vmatprep.subr.mxu0 0.0
  %90 = vmatpush1.msra.mxu0 %v24
  %91 = vmatprep.subr.mxu0 0.0
  %92 = vmatpush2.msra.mxu0 0.0
  %93 = vmatprep.subr.mxu0 0.0
  %94 = vmatpush2.msra.mxu0 0.0
  %95 = vmatprep.subr.mxu0 0.0
  %96 = vmatpush2.msra.mxu0 0.0
  %97 = vmatprep.subr.mxu0 0.0
  %98 = vmatpush2.msra.mxu0 0.0
  %99 = vmatprep.subr.mxu0 0.0
  %100 = vmatpush2.msra.mxu0 0.0
  %101 = vmatprep.subr.mxu0 0.0
  %102 = vmatpush2.msra.mxu0 0.0
  %103 = vmatprep.subr.mxu0 0.0
  %104 = vmatpush2.msra.mxu0 0.0
  %105 = vmatprep.subr.mxu0 0.0
  %106 = vmatpush2.msra.mxu0 0.0
  %107 = vmatprep.subr.mxu0 0.0
  %108 = vmatpush2.msra.mxu0 0.0
  %109 = vmatprep.subr.mxu0 0.0
  %110 = vmatpush2.msra.mxu0 0.0
  %111 = vmatprep.subr.mxu0 0.0
  %112 = vmatpush2.msra.mxu0 0.0
  %113 = vmatprep.subr.mxu0 0.0
  %114 = vmatpush2.msra.mxu0 0.0
  %115 = vmatprep.subr.mxu0 0.0
  %116 = vmatpush2.msra.mxu0 0.0
  %117 = vmatprep.subr.mxu0 0.0
  %118 = vmatpush2.msra.mxu0 0.0
  %119 = vmatprep.subr.mxu0 0.0
  %120 = vmatpush2.msra.mxu0 0.0
  %121 = vmatprep.subr.mxu0 0.0
  %122 = vmatpush2.msra.mxu0 0.0
  %123 = vmatprep.mubr.f32.mxu0 0.0
  %124 = vmatmul.mubr.f32.gmra.mxu0 %v54
  %v125 = vpop.f32.mrf.mxu0
  %v126 = vadd.f32 0.0, %v125
  %v127 = vpop.f32.mrf.mxu0
  %128 = vmatprep.mubr.f32.mxu0 0.0
  %129 = vmatmul.mubr.f32.gmra.mxu0 %v57
  %v130 = vpop.f32.mrf.mxu0
  %v131 = vadd.f32 0.0, %v130
  %v132 = vpop.f32.mrf.mxu0
  %133 = vdwg.mxu0
  %134 = vmatprep.subr.mxu0 0.0
  %135 = vmatpush1.msra.mxu0 0.0
  %136 = vmatprep.subr.mxu0 0.0
  %137 = vmatpush1.msra.mxu0 0.0
  %138 = vmatprep.subr.mxu0 0.0
  %139 = vmatpush1.msra.mxu0 0.0
  %140 = vmatprep.subr.mxu0 0.0
  %141 = vmatpush1.msra.mxu0 0.0
  %142 = vmatprep.subr.mxu0 0.0
  %143 = vmatpush1.msra.mxu0 0.0
  %144 = vmatprep.subr.mxu0 0.0
  %145 = vmatpush1.msra.mxu0 0.0
  %146 = vmatprep.subr.mxu0 0.0
  %147 = vmatpush1.msra.mxu0 0.0
  %148 = vmatprep.subr.mxu0 0.0
  %149 = vmatpush1.msra.mxu0 0.0
  %150 = vmatprep.subr.mxu0 0.0
  %151 = vmatpush1.msra.mxu0 0.0
  %152 = vmatprep.subr.mxu0 0.0
  %153 = vmatpush1.msra.mxu0 0.0
  %154 = vmatprep.subr.mxu0 0.0
  %155 = vmatpush1.msra.mxu0 0.0
  %156 = vmatprep.subr.mxu0 0.0
  %157 = vmatpush1.msra.mxu0 0.0
  %158 = vmatprep.subr.mxu0 0.0
  %159 = vmatpush1.msra.mxu0 %v31
  %160 = vmatprep.subr.mxu0 0.0
  %161 = vmatpush1.msra.mxu0 %v30
  %162 = vmatprep.subr.mxu0 0.0
  %163 = vmatpush1.msra.mxu0 %v29
  %164 = vmatprep.subr.mxu0 0.0
  %165 = vmatpush1.msra.mxu0 %v28
  %166 = vmatprep.subr.mxu0 0.0
  %167 = vmatpush2.msra.mxu0 0.0
  %168 = vmatprep.subr.mxu0 0.0
  %169 = vmatpush2.msra.mxu0 0.0
  %170 = vmatprep.subr.mxu0 0.0
  %171 = vmatpush2.msra.mxu0 0.0
  %172 = vmatprep.subr.mxu0 0.0
  %173 = vmatpush2.msra.mxu0 0.0
  %174 = vmatprep.subr.mxu0 0.0
  %175 = vmatpush2.msra.mxu0 0.0
  %176 = vmatprep.subr.mxu0 0.0
  %177 = vmatpush2.msra.mxu0 0.0
  %178 = vmatprep.subr.mxu0 0.0
  %179 = vmatpush2.msra.mxu0 0.0
  %180 = vmatprep.subr.mxu0 0.0
  %181 = vmatpush2.msra.mxu0 0.0
  %182 = vmatprep.subr.mxu0 0.0
  %183 = vmatpush2.msra.mxu0 0.0
  %184 = vmatprep.subr.mxu0 0.0
  %185 = vmatpush2.msra.mxu0 0.0
  %186 = vmatprep.subr.mxu0 0.0
  %187 = vmatpush2.msra.mxu0 0.0
  %188 = vmatprep.subr.mxu0 0.0
  %189 = vmatpush2.msra.mxu0 0.0
  %190 = vmatprep.subr.mxu0 0.0
  %191 = vmatpush2.msra.mxu0 0.0
  %192 = vmatprep.subr.mxu0 0.0
  %193 = vmatpush2.msra.mxu0 0.0
  %194 = vmatprep.subr.mxu0 0.0
  %195 = vmatpush2.msra.mxu0 0.0
  %196 = vmatprep.subr.mxu0 0.0
  %197 = vmatpush2.msra.mxu0 0.0
  %198 = vmatprep.mubr.f32.mxu0 0.0
  %199 = vmatmul.mubr.f32.gmra.mxu0 %v54
  %v200 = vpop.f32.mrf.mxu0
  %v201 = vadd.f32 0.0, %v200
  %v202 = vpop.f32.mrf.mxu0
  %203 = vmatprep.mubr.f32.mxu0 0.0
  %204 = vmatmul.mubr.f32.gmra.mxu0 %v57
  %v205 = vpop.f32.mrf.mxu0
  %v206 = vadd.f32 0.0, %v205
  %v207 = vpop.f32.mrf.mxu0
  %208 = vdwg.mxu0
  %209 = vmatprep.subr.mxu0 0.0
  %210 = vmatpush1.msra.mxu0 0.0
  %211 = vmatprep.subr.mxu0 0.0
  %212 = vmatpush1.msra.mxu0 0.0
  %213 = vmatprep.subr.mxu0 0.0
  %214 = vmatpush1.msra.mxu0 0.0
  %215 = vmatprep.subr.mxu0 0.0
  %216 = vmatpush1.msra.mxu0 0.0
  %217 = vmatprep.subr.mxu0 0.0
  %218 = vmatpush1.msra.mxu0 0.0
  %219 = vmatprep.subr.mxu0 0.0
  %220 = vmatpush1.msra.mxu0 0.0
  %221 = vmatprep.subr.mxu0 0.0
  %222 = vmatpush1.msra.mxu0 0.0
  %223 = vmatprep.subr.mxu0 0.0
  %224 = vmatpush1.msra.mxu0 0.0
  %225 = vmatprep.subr.mxu0 0.0
  %226 = vmatpush1.msra.mxu0 0.0
  %227 = vmatprep.subr.mxu0 0.0
  %228 = vmatpush1.msra.mxu0 0.0
  %229 = vmatprep.subr.mxu0 0.0
  %230 = vmatpush1.msra.mxu0 0.0
  %231 = vmatprep.subr.mxu0 0.0
  %232 = vmatpush1.msra.mxu0 0.0
  %233 = vmatprep.subr.mxu0 0.0
  %234 = vmatpush1.msra.mxu0 %v35
  %235 = vmatprep.subr.mxu0 0.0
  %236 = vmatpush1.msra.mxu0 %v34
  %237 = vmatprep.subr.mxu0 0.0
  %238 = vmatpush1.msra.mxu0 %v33
  %239 = vmatprep.subr.mxu0 0.0
  %240 = vmatpush1.msra.mxu0 %v32
  %241 = vmatprep.subr.mxu0 0.0
  %242 = vmatpush2.msra.mxu0 0.0
  %243 = vmatprep.subr.mxu0 0.0
  %244 = vmatpush2.msra.mxu0 0.0
  %245 = vmatprep.subr.mxu0 0.0
  %246 = vmatpush2.msra.mxu0 0.0
  %247 = vmatprep.subr.mxu0 0.0
  %248 = vmatpush2.msra.mxu0 0.0
  %249 = vmatprep.subr.mxu0 0.0
  %250 = vmatpush2.msra.mxu0 0.0
  %251 = vmatprep.subr.mxu0 0.0
  %252 = vmatpush2.msra.mxu0 0.0
  %253 = vmatprep.subr.mxu0 0.0
  %254 = vmatpush2.msra.mxu0 0.0
  %255 = vmatprep.subr.mxu0 0.0
  %256 = vmatpush2.msra.mxu0 0.0
  %257 = vmatprep.subr.mxu0 0.0
  %258 = vmatpush2.msra.mxu0 0.0
  %259 = vmatprep.subr.mxu0 0.0
  %260 = vmatpush2.msra.mxu0 0.0
  %261 = vmatprep.subr.mxu0 0.0
  %262 = vmatpush2.msra.mxu0 0.0
  %263 = vmatprep.subr.mxu0 0.0
  %264 = vmatpush2.msra.mxu0 0.0
  %265 = vmatprep.subr.mxu0 0.0
  %266 = vmatpush2.msra.mxu0 0.0
  %267 = vmatprep.subr.mxu0 0.0
  %268 = vmatpush2.msra.mxu0 0.0
  %269 = vmatprep.subr.mxu0 0.0
  %270 = vmatpush2.msra.mxu0 0.0
  %271 = vmatprep.subr.mxu0 0.0
  %272 = vmatpush2.msra.mxu0 0.0
  %273 = vmatprep.mubr.f32.mxu0 0.0
  %274 = vmatmul.mubr.f32.gmra.mxu0 %v54
  %v275 = vpop.f32.mrf.mxu0
  %v276 = vadd.f32 0.0, %v275
  %v277 = vpop.f32.mrf.mxu0
  %278 = vmatprep.mubr.f32.mxu0 0.0
  %279 = vmatmul.mubr.f32.gmra.mxu0 %v57
  %v280 = vpop.f32.mrf.mxu0
  %v281 = vadd.f32 0.0, %v280
  %v282 = vpop.f32.mrf.mxu0
  %283 = vdwg.mxu0
  %284 = vmatprep.subr.mxu0 0.0
  %285 = vmatpush1.msra.mxu0 0.0
  %286 = vmatprep.subr.mxu0 0.0
  %287 = vmatpush1.msra.mxu0 0.0
  %288 = vmatprep.subr.mxu0 0.0
  %289 = vmatpush1.msra.mxu0 0.0
  %290 = vmatprep.subr.mxu0 0.0
  %291 = vmatpush1.msra.mxu0 0.0
  %292 = vmatprep.subr.mxu0 0.0
  %293 = vmatpush1.msra.mxu0 0.0
  %294 = vmatprep.subr.mxu0 0.0
  %295 = vmatpush1.msra.mxu0 0.0
  %296 = vmatprep.subr.mxu0 0.0
  %297 = vmatpush1.msra.mxu0 0.0
  %298 = vmatprep.subr.mxu0 0.0
  %299 = vmatpush1.msra.mxu0 0.0
  %300 = vmatprep.subr.mxu0 0.0
  %301 = vmatpush1.msra.mxu0 0.0
  %302 = vmatprep.subr.mxu0 0.0
  %303 = vmatpush1.msra.mxu0 0.0
  %304 = vmatprep.subr.mxu0 0.0
  %305 = vmatpush1.msra.mxu0 0.0
  %306 = vmatprep.subr.mxu0 0.0
  %307 = vmatpush1.msra.mxu0 0.0
  %308 = vmatprep.subr.mxu0 0.0
  %309 = vmatpush1.msra.mxu0 %v39
  %310 = vmatprep.subr.mxu0 0.0
  %311 = vmatpush1.msra.mxu0 %v38
  %312 = vmatprep.subr.mxu0 0.0
  %313 = vmatpush1.msra.mxu0 %v37
  %314 = vmatprep.subr.mxu0 0.0
  %315 = vmatpush1.msra.mxu0 %v36
  %316 = vmatprep.subr.mxu0 0.0
  %317 = vmatpush2.msra.mxu0 0.0
  %318 = vmatprep.subr.mxu0 0.0
  %319 = vmatpush2.msra.mxu0 0.0
  %320 = vmatprep.subr.mxu0 0.0
  %321 = vmatpush2.msra.mxu0 0.0
  %322 = vmatprep.subr.mxu0 0.0
  %323 = vmatpush2.msra.mxu0 0.0
  %324 = vmatprep.subr.mxu0 0.0
  %325 = vmatpush2.msra.mxu0 0.0
  %326 = vmatprep.subr.mxu0 0.0
  %327 = vmatpush2.msra.mxu0 0.0
  %328 = vmatprep.subr.mxu0 0.0
  %329 = vmatpush2.msra.mxu0 0.0
  %330 = vmatprep.subr.mxu0 0.0
  %331 = vmatpush2.msra.mxu0 0.0
  %332 = vmatprep.subr.mxu0 0.0
  %333 = vmatpush2.msra.mxu0 0.0
  %334 = vmatprep.subr.mxu0 0.0
  %335 = vmatpush2.msra.mxu0 0.0
  %336 = vmatprep.subr.mxu0 0.0
  %337 = vmatpush2.msra.mxu0 0.0
  %338 = vmatprep.subr.mxu0 0.0
  %339 = vmatpush2.msra.mxu0 0.0
  %340 = vmatprep.subr.mxu0 0.0
  %341 = vmatpush2.msra.mxu0 0.0
  %342 = vmatprep.subr.mxu0 0.0
  %343 = vmatpush2.msra.mxu0 0.0
  %344 = vmatprep.subr.mxu0 0.0
  %345 = vmatpush2.msra.mxu0 0.0
  %346 = vmatprep.subr.mxu0 0.0
  %347 = vmatpush2.msra.mxu0 0.0
  %348 = vmatprep.mubr.f32.mxu0 0.0
  %349 = vmatmul.mubr.f32.gmra.mxu0 %v54
  %v350 = vpop.f32.mrf.mxu0
  %v351 = vadd.f32 0.0, %v350
  %v352 = vpop.f32.mrf.mxu0
  %353 = vmatprep.mubr.f32.mxu0 0.0
  %354 = vmatmul.mubr.f32.gmra.mxu0 %v57
  %v355 = vpop.f32.mrf.mxu0
  %v356 = vadd.f32 0.0, %v355
  %v357 = vpop.f32.mrf.mxu0
  %358 = vdwg.mxu0
  %vm359 = vcmask 64512
  %v361 = vsel %vm359, %v126, 0
  %v364 = vsel %vm359, %v131, 0
  %366 = vmatprep.subr.mxu0 0.0
  %367 = vmatpush1.msra.mxu0 0.0
  %368 = vmatprep.subr.mxu0 0.0
  %369 = vmatpush1.msra.mxu0 0.0
  %370 = vmatprep.subr.mxu0 0.0
  %371 = vmatpush1.msra.mxu0 0.0
  %372 = vmatprep.subr.mxu0 0.0
  %373 = vmatpush1.msra.mxu0 0.0
  %374 = vmatprep.subr.mxu0 0.0
  %375 = vmatpush1.msra.mxu0 0.0
  %376 = vmatprep.subr.mxu0 0.0
  %377 = vmatpush1.msra.mxu0 0.0
  %378 = vmatprep.subr.mxu0 0.0
  %379 = vmatpush1.msra.mxu0 0.0
  %380 = vmatprep.subr.mxu0 0.0
  %381 = vmatpush1.msra.mxu0 0.0
  %382 = vmatprep.subr.mxu0 0.0
  %383 = vmatpush1.msra.mxu0 0.0
  %384 = vmatprep.subr.mxu0 0.0
  %385 = vmatpush1.msra.mxu0 0.0
  %386 = vmatprep.subr.mxu0 0.0
  %387 = vmatpush1.msra.mxu0 0.0
  %388 = vmatprep.subr.mxu0 0.0
  %389 = vmatpush1.msra.mxu0 0.0
  %390 = vmatprep.subr.mxu0 0.0
  %391 = vmatpush1.msra.mxu0 0.0
  %392 = vmatprep.subr.mxu0 0.0
  %393 = vmatpush1.msra.mxu0 0.0
  %394 = vmatprep.subr.mxu0 0.0
  %395 = vmatpush1.msra.mxu0 0.0
  %396 = vmatprep.subr.mxu0 0.0
  %397 = vmatpush1.msra.mxu0 %v44
  %398 = vmatprep.subr.mxu0 0.0
  %399 = vmatpush2.msra.mxu0 0.0
  %400 = vmatprep.subr.mxu0 0.0
  %401 = vmatpush2.msra.mxu0 0.0
  %402 = vmatprep.subr.mxu0 0.0
  %403 = vmatpush2.msra.mxu0 0.0
  %404 = vmatprep.subr.mxu0 0.0
  %405 = vmatpush2.msra.mxu0 0.0
  %406 = vmatprep.subr.mxu0 0.0
  %407 = vmatpush2.msra.mxu0 0.0
  %408 = vmatprep.subr.mxu0 0.0
  %409 = vmatpush2.msra.mxu0 0.0
  %410 = vmatprep.subr.mxu0 0.0
  %411 = vmatpush2.msra.mxu0 0.0
  %412 = vmatprep.subr.mxu0 0.0
  %413 = vmatpush2.msra.mxu0 0.0
  %414 = vmatprep.subr.mxu0 0.0
  %415 = vmatpush2.msra.mxu0 0.0
  %416 = vmatprep.subr.mxu0 0.0
  %417 = vmatpush2.msra.mxu0 0.0
  %418 = vmatprep.subr.mxu0 0.0
  %419 = vmatpush2.msra.mxu0 0.0
  %420 = vmatprep.subr.mxu0 0.0
  %421 = vmatpush2.msra.mxu0 0.0
  %422 = vmatprep.subr.mxu0 0.0
  %423 = vmatpush2.msra.mxu0 0.0
  %424 = vmatprep.subr.mxu0 0.0
  %425 = vmatpush2.msra.mxu0 0.0
  %426 = vmatprep.subr.mxu0 0.0
  %427 = vmatpush2.msra.mxu0 0.0
  %428 = vmatprep.subr.mxu0 0.0
  %429 = vmatpush2.msra.mxu0 0.0
  %430 = vmatprep.mubr.f32.mxu0 0.0
  %431 = vmatmul.mubr.f32.gmra.mxu0 %v361
  %v432 = vpop.f32.mrf.mxu0
  %v433 = vadd.f32 0.0, %v432
  %v434 = vpop.f32.mrf.mxu0
  %435 = vmatprep.mubr.f32.mxu0 0.0
  %436 = vmatmul.mubr.f32.gmra.mxu0 %v364
  %v437 = vpop.f32.mrf.mxu0
  %v438 = vadd.f32 0.0, %v437
  %v439 = vpop.f32.mrf.mxu0
  %440 = vdwg.mxu0
  %v442 = vsel %vm359, %v201, 0
  %v445 = vsel %vm359, %v206, 0
  %447 = vmatprep.subr.mxu0 0.0
  %448 = vmatpush1.msra.mxu0 0.0
  %449 = vmatprep.subr.mxu0 0.0
  %450 = vmatpush1.msra.mxu0 0.0
  %451 = vmatprep.subr.mxu0 0.0
  %452 = vmatpush1.msra.mxu0 0.0
  %453 = vmatprep.subr.mxu0 0.0
  %454 = vmatpush1.msra.mxu0 0.0
  %455 = vmatprep.subr.mxu0 0.0
  %456 = vmatpush1.msra.mxu0 0.0
  %457 = vmatprep.subr.mxu0 0.0
  %458 = vmatpush1.msra.mxu0 0.0
  %459 = vmatprep.subr.mxu0 0.0
  %460 = vmatpush1.msra.mxu0 0.0
  %461 = vmatprep.subr.mxu0 0.0
  %462 = vmatpush1.msra.mxu0 0.0
  %463 = vmatprep.subr.mxu0 0.0
  %464 = vmatpush1.msra.mxu0 0.0
  %465 = vmatprep.subr.mxu0 0.0
  %466 = vmatpush1.msra.mxu0 0.0
  %467 = vmatprep.subr.mxu0 0.0
  %468 = vmatpush1.msra.mxu0 0.0
  %469 = vmatprep.subr.mxu0 0.0
  %470 = vmatpush1.msra.mxu0 0.0
  %471 = vmatprep.subr.mxu0 0.0
  %472 = vmatpush1.msra.mxu0 0.0
  %473 = vmatprep.subr.mxu0 0.0
  %474 = vmatpush1.msra.mxu0 0.0
  %475 = vmatprep.subr.mxu0 0.0
  %476 = vmatpush1.msra.mxu0 0.0
  %477 = vmatprep.subr.mxu0 0.0
  %478 = vmatpush1.msra.mxu0 %v45
  %479 = vmatprep.subr.mxu0 0.0
  %480 = vmatpush2.msra.mxu0 0.0
  %481 = vmatprep.subr.mxu0 0.0
  %482 = vmatpush2.msra.mxu0 0.0
  %483 = vmatprep.subr.mxu0 0.0
  %484 = vmatpush2.msra.mxu0 0.0
  %485 = vmatprep.subr.mxu0 0.0
  %486 = vmatpush2.msra.mxu0 0.0
  %487 = vmatprep.subr.mxu0 0.0
  %488 = vmatpush2.msra.mxu0 0.0
  %489 = vmatprep.subr.mxu0 0.0
  %490 = vmatpush2.msra.mxu0 0.0
  %491 = vmatprep.subr.mxu0 0.0
  %492 = vmatpush2.msra.mxu0 0.0
  %493 = vmatprep.subr.mxu0 0.0
  %494 = vmatpush2.msra.mxu0 0.0
  %495 = vmatprep.subr.mxu0 0.0
  %496 = vmatpush2.msra.mxu0 0.0
  %497 = vmatprep.subr.mxu0 0.0
  %498 = vmatpush2.msra.mxu0 0.0
  %499 = vmatprep.subr.mxu0 0.0
  %500 = vmatpush2.msra.mxu0 0.0
  %501 = vmatprep.subr.mxu0 0.0
  %502 = vmatpush2.msra.mxu0 0.0
  %503 = vmatprep.subr.mxu0 0.0
  %504 = vmatpush2.msra.mxu0 0.0
  %505 = vmatprep.subr.mxu0 0.0
  %506 = vmatpush2.msra.mxu0 0.0
  %507 = vmatprep.subr.mxu0 0.0
  %508 = vmatpush2.msra.mxu0 0.0
  %509 = vmatprep.subr.mxu0 0.0
  %510 = vmatpush2.msra.mxu0 0.0
  %511 = vmatprep.mubr.f32.mxu0 0.0
  %512 = vmatmul.mubr.f32.gmra.mxu0 %v442
  %v513 = vpop.f32.mrf.mxu0
  %v514 = vadd.f32 0.0, %v513
  %v515 = vpop.f32.mrf.mxu0
  %516 = vmatprep.mubr.f32.mxu0 0.0
  %517 = vmatmul.mubr.f32.gmra.mxu0 %v445
  %v518 = vpop.f32.mrf.mxu0
  %v519 = vadd.f32 0.0, %v518
  %v520 = vpop.f32.mrf.mxu0
  %521 = vdwg.mxu0
  %v523 = vsel %vm359, %v276, 0
  %v526 = vsel %vm359, %v281, 0
  %528 = vmatprep.subr.mxu0 0.0
  %529 = vmatpush1.msra.mxu0 0.0
  %530 = vmatprep.subr.mxu0 0.0
  %531 = vmatpush1.msra.mxu0 0.0
  %532 = vmatprep.subr.mxu0 0.0
  %533 = vmatpush1.msra.mxu0 0.0
  %534 = vmatprep.subr.mxu0 0.0
  %535 = vmatpush1.msra.mxu0 0.0
  %536 = vmatprep.subr.mxu0 0.0
  %537 = vmatpush1.msra.mxu0 0.0
  %538 = vmatprep.subr.mxu0 0.0
  %539 = vmatpush1.msra.mxu0 0.0
  %540 = vmatprep.subr.mxu0 0.0
  %541 = vmatpush1.msra.mxu0 0.0
  %542 = vmatprep.subr.mxu0 0.0
  %543 = vmatpush1.msra.mxu0 0.0
  %544 = vmatprep.subr.mxu0 0.0
  %545 = vmatpush1.msra.mxu0 0.0
  %546 = vmatprep.subr.mxu0 0.0
  %547 = vmatpush1.msra.mxu0 0.0
  %548 = vmatprep.subr.mxu0 0.0
  %549 = vmatpush1.msra.mxu0 0.0
  %550 = vmatprep.subr.mxu0 0.0
  %551 = vmatpush1.msra.mxu0 0.0
  %552 = vmatprep.subr.mxu0 0.0
  %553 = vmatpush1.msra.mxu0 0.0
  %554 = vmatprep.subr.mxu0 0.0
  %555 = vmatpush1.msra.mxu0 0.0
  %556 = vmatprep.subr.mxu0 0.0
  %557 = vmatpush1.msra.mxu0 0.0
  %558 = vmatprep.subr.mxu0 0.0
  %559 = vmatpush1.msra.mxu0 %v46
  %560 = vmatprep.subr.mxu0 0.0
  %561 = vmatpush2.msra.mxu0 0.0
  %562 = vmatprep.subr.mxu0 0.0
  %563 = vmatpush2.msra.mxu0 0.0
  %564 = vmatprep.subr.mxu0 0.0
  %565 = vmatpush2.msra.mxu0 0.0
  %566 = vmatprep.subr.mxu0 0.0
  %567 = vmatpush2.msra.mxu0 0.0
  %568 = vmatprep.subr.mxu0 0.0
  %569 = vmatpush2.msra.mxu0 0.0
  %570 = vmatprep.subr.mxu0 0.0
  %571 = vmatpush2.msra.mxu0 0.0
  %572 = vmatprep.subr.mxu0 0.0
  %573 = vmatpush2.msra.mxu0 0.0
  %574 = vmatprep.subr.mxu0 0.0
  %575 = vmatpush2.msra.mxu0 0.0
  %576 = vmatprep.subr.mxu0 0.0
  %577 = vmatpush2.msra.mxu0 0.0
  %578 = vmatprep.subr.mxu0 0.0
  %579 = vmatpush2.msra.mxu0 0.0
  %580 = vmatprep.subr.mxu0 0.0
  %581 = vmatpush2.msra.mxu0 0.0
  %582 = vmatprep.subr.mxu0 0.0
  %583 = vmatpush2.msra.mxu0 0.0
  %584 = vmatprep.subr.mxu0 0.0
  %585 = vmatpush2.msra.mxu0 0.0
  %586 = vmatprep.subr.mxu0 0.0
  %587 = vmatpush2.msra.mxu0 0.0
  %588 = vmatprep.subr.mxu0 0.0
  %589 = vmatpush2.msra.mxu0 0.0
  %590 = vmatprep.subr.mxu0 0.0
  %591 = vmatpush2.msra.mxu0 0.0
  %592 = vmatprep.mubr.f32.mxu0 0.0
  %593 = vmatmul.mubr.f32.gmra.mxu0 %v523
  %v594 = vpop.f32.mrf.mxu0
  %v595 = vadd.f32 0.0, %v594
  %v596 = vpop.f32.mrf.mxu0
  %597 = vmatprep.mubr.f32.mxu0 0.0
  %598 = vmatmul.mubr.f32.gmra.mxu0 %v526
  %v599 = vpop.f32.mrf.mxu0
  %v600 = vadd.f32 0.0, %v599
  %v601 = vpop.f32.mrf.mxu0
  %602 = vdwg.mxu0
  %v604 = vsel %vm359, %v351, 0
  %v607 = vsel %vm359, %v356, 0
  %609 = vmatprep.subr.mxu0 0.0
  %610 = vmatpush1.msra.mxu0 0.0
  %611 = vmatprep.subr.mxu0 0.0
  %612 = vmatpush1.msra.mxu0 0.0
  %613 = vmatprep.subr.mxu0 0.0
  %614 = vmatpush1.msra.mxu0 0.0
  %615 = vmatprep.subr.mxu0 0.0
  %616 = vmatpush1.msra.mxu0 0.0
  %617 = vmatprep.subr.mxu0 0.0
  %618 = vmatpush1.msra.mxu0 0.0
  %619 = vmatprep.subr.mxu0 0.0
  %620 = vmatpush1.msra.mxu0 0.0
  %621 = vmatprep.subr.mxu0 0.0
  %622 = vmatpush1.msra.mxu0 0.0
  %623 = vmatprep.subr.mxu0 0.0
  %624 = vmatpush1.msra.mxu0 0.0
  %625 = vmatprep.subr.mxu0 0.0
  %626 = vmatpush1.msra.mxu0 0.0
  %627 = vmatprep.subr.mxu0 0.0
  %628 = vmatpush1.msra.mxu0 0.0
  %629 = vmatprep.subr.mxu0 0.0
  %630 = vmatpush1.msra.mxu0 0.0
  %631 = vmatprep.subr.mxu0 0.0
  %632 = vmatpush1.msra.mxu0 0.0
  %633 = vmatprep.subr.mxu0 0.0
  %634 = vmatpush1.msra.mxu0 0.0
  %635 = vmatprep.subr.mxu0 0.0
  %636 = vmatpush1.msra.mxu0 0.0
  %637 = vmatprep.subr.mxu0 0.0
  %638 = vmatpush1.msra.mxu0 0.0
  %639 = vmatprep.subr.mxu0 0.0
  %640 = vmatpush1.msra.mxu0 %v47
  %641 = vmatprep.subr.mxu0 0.0
  %642 = vmatpush2.msra.mxu0 0.0
  %643 = vmatprep.subr.mxu0 0.0
  %644 = vmatpush2.msra.mxu0 0.0
  %645 = vmatprep.subr.mxu0 0.0
  %646 = vmatpush2.msra.mxu0 0.0
  %647 = vmatprep.subr.mxu0 0.0
  %648 = vmatpush2.msra.mxu0 0.0
  %649 = vmatprep.subr.mxu0 0.0
  %650 = vmatpush2.msra.mxu0 0.0
  %651 = vmatprep.subr.mxu0 0.0
  %652 = vmatpush2.msra.mxu0 0.0
  %653 = vmatprep.subr.mxu0 0.0
  %654 = vmatpush2.msra.mxu0 0.0
  %655 = vmatprep.subr.mxu0 0.0
  %656 = vmatpush2.msra.mxu0 0.0
  %657 = vmatprep.subr.mxu0 0.0
  %658 = vmatpush2.msra.mxu0 0.0
  %659 = vmatprep.subr.mxu0 0.0
  %660 = vmatpush2.msra.mxu0 0.0
  %661 = vmatprep.subr.mxu0 0.0
  %662 = vmatpush2.msra.mxu0 0.0
  %663 = vmatprep.subr.mxu0 0.0
  %664 = vmatpush2.msra.mxu0 0.0
  %665 = vmatprep.subr.mxu0 0.0
  %666 = vmatpush2.msra.mxu0 0.0
  %667 = vmatprep.subr.mxu0 0.0
  %668 = vmatpush2.msra.mxu0 0.0
  %669 = vmatprep.subr.mxu0 0.0
  %670 = vmatpush2.msra.mxu0 0.0
  %671 = vmatprep.subr.mxu0 0.0
  %672 = vmatpush2.msra.mxu0 0.0
  %673 = vmatprep.mubr.f32.mxu0 0.0
  %674 = vmatmul.mubr.f32.gmra.mxu0 %v604
  %v675 = vpop.f32.mrf.mxu0
  %v676 = vadd.f32 0.0, %v675
  %v677 = vpop.f32.mrf.mxu0
  %678 = vmatprep.mubr.f32.mxu0 0.0
  %679 = vmatmul.mubr.f32.gmra.mxu0 %v607
  %v680 = vpop.f32.mrf.mxu0
  %v681 = vadd.f32 0.0, %v680
  %v682 = vpop.f32.mrf.mxu0
  %683 = vdwg.mxu0
  %v685 = vsel %vm359, %v48, 0
  %687 = vmatprep.subr.mxu0 0.0
  %688 = vmatpush1.xpose.msra.mxu0 0.0
  %689 = vmatprep.subr.mxu0 0.0
  %690 = vmatpush1.xpose.msra.mxu0 0.0
  %691 = vmatprep.subr.mxu0 0.0
  %692 = vmatpush1.xpose.msra.mxu0 0.0
  %693 = vmatprep.subr.mxu0 0.0
  %694 = vmatpush1.xpose.msra.mxu0 0.0
  %695 = vmatprep.subr.mxu0 0.0
  %696 = vmatpush1.xpose.msra.mxu0 0.0
  %697 = vmatprep.subr.mxu0 0.0
  %698 = vmatpush1.xpose.msra.mxu0 0.0
  %699 = vmatprep.subr.mxu0 0.0
  %700 = vmatpush1.xpose.msra.mxu0 0.0
  %701 = vmatprep.subr.mxu0 0.0
  %702 = vmatpush1.xpose.msra.mxu0 0.0
  %703 = vmatprep.subr.mxu0 0.0
  %704 = vmatpush1.xpose.msra.mxu0 0.0
  %705 = vmatprep.subr.mxu0 0.0
  %706 = vmatpush1.xpose.msra.mxu0 0.0
  %707 = vmatprep.subr.mxu0 0.0
  %708 = vmatpush1.xpose.msra.mxu0 0.0
  %709 = vmatprep.subr.mxu0 0.0
  %710 = vmatpush1.xpose.msra.mxu0 0.0
  %711 = vmatprep.subr.mxu0 0.0
  %712 = vmatpush1.xpose.msra.mxu0 0.0
  %713 = vmatprep.subr.mxu0 0.0
  %714 = vmatpush1.xpose.msra.mxu0 0.0
  %715 = vmatprep.subr.mxu0 0.0
  %716 = vmatpush1.xpose.msra.mxu0 %v364
  %717 = vmatprep.subr.mxu0 0.0
  %718 = vmatpush1.xpose.msra.mxu0 %v361
  %719 = vmatprep.subr.mxu0 0.0
  %720 = vmatpush2.xpose.msra.mxu0 0.0
  %721 = vmatprep.subr.mxu0 0.0
  %722 = vmatpush2.xpose.msra.mxu0 0.0
  %723 = vmatprep.subr.mxu0 0.0
  %724 = vmatpush2.xpose.msra.mxu0 0.0
  %725 = vmatprep.subr.mxu0 0.0
  %726 = vmatpush2.xpose.msra.mxu0 0.0
  %727 = vmatprep.subr.mxu0 0.0
  %728 = vmatpush2.xpose.msra.mxu0 0.0
  %729 = vmatprep.subr.mxu0 0.0
  %730 = vmatpush2.xpose.msra.mxu0 0.0
  %731 = vmatprep.subr.mxu0 0.0
  %732 = vmatpush2.xpose.msra.mxu0 0.0
  %733 = vmatprep.subr.mxu0 0.0
  %734 = vmatpush2.xpose.msra.mxu0 0.0
  %735 = vmatprep.subr.mxu0 0.0
  %736 = vmatpush2.xpose.msra.mxu0 0.0
  %737 = vmatprep.subr.mxu0 0.0
  %738 = vmatpush2.xpose.msra.mxu0 0.0
  %739 = vmatprep.subr.mxu0 0.0
  %740 = vmatpush2.xpose.msra.mxu0 0.0
  %741 = vmatprep.subr.mxu0 0.0
  %742 = vmatpush2.xpose.msra.mxu0 0.0
  %743 = vmatprep.subr.mxu0 0.0
  %744 = vmatpush2.xpose.msra.mxu0 0.0
  %745 = vmatprep.subr.mxu0 0.0
  %746 = vmatpush2.xpose.msra.mxu0 0.0
  %747 = vmatprep.subr.mxu0 0.0
  %748 = vmatpush2.xpose.msra.mxu0 0.0
  %749 = vmatprep.subr.mxu0 0.0
  %750 = vmatpush2.xpose.msra.mxu0 0.0
  %751 = vmatprep.mubr.f32.mxu0 0.0
  %752 = vmatmul.mubr.f32.gmra.mxu0 %v685
  %v753 = vpop.f32.mrf.mxu0
  %v754 = vadd.f32 0.0, %v753
  %v755 = vpop.f32.mrf.mxu0
  %756 = vdwg.mxu0
  %v758 = vsel %vm359, %v49, 0
  %760 = vmatprep.subr.mxu0 0.0
  %761 = vmatpush1.xpose.msra.mxu0 0.0
  %762 = vmatprep.subr.mxu0 0.0
  %763 = vmatpush1.xpose.msra.mxu0 0.0
  %764 = vmatprep.subr.mxu0 0.0
  %765 = vmatpush1.xpose.msra.mxu0 0.0
  %766 = vmatprep.subr.mxu0 0.0
  %767 = vmatpush1.xpose.msra.mxu0 0.0
  %768 = vmatprep.subr.mxu0 0.0
  %769 = vmatpush1.xpose.msra.mxu0 0.0
  %770 = vmatprep.subr.mxu0 0.0
  %771 = vmatpush1.xpose.msra.mxu0 0.0
  %772 = vmatprep.subr.mxu0 0.0
  %773 = vmatpush1.xpose.msra.mxu0 0.0
  %774 = vmatprep.subr.mxu0 0.0
  %775 = vmatpush1.xpose.msra.mxu0 0.0
  %776 = vmatprep.subr.mxu0 0.0
  %777 = vmatpush1.xpose.msra.mxu0 0.0
  %778 = vmatprep.subr.mxu0 0.0
  %779 = vmatpush1.xpose.msra.mxu0 0.0
  %780 = vmatprep.subr.mxu0 0.0
  %781 = vmatpush1.xpose.msra.mxu0 0.0
  %782 = vmatprep.subr.mxu0 0.0
  %783 = vmatpush1.xpose.msra.mxu0 0.0
  %784 = vmatprep.subr.mxu0 0.0
  %785 = vmatpush1.xpose.msra.mxu0 0.0
  %786 = vmatprep.subr.mxu0 0.0
  %787 = vmatpush1.xpose.msra.mxu0 0.0
  %788 = vmatprep.subr.mxu0 0.0
  %789 = vmatpush1.xpose.msra.mxu0 %v445
  %790 = vmatprep.subr.mxu0 0.0
  %791 = vmatpush1.xpose.msra.mxu0 %v442
  %792 = vmatprep.subr.mxu0 0.0
  %793 = vmatpush2.xpose.msra.mxu0 0.0
  %794 = vmatprep.subr.mxu0 0.0
  %795 = vmatpush2.xpose.msra.mxu0 0.0
  %796 = vmatprep.subr.mxu0 0.0
  %797 = vmatpush2.xpose.msra.mxu0 0.0
  %798 = vmatprep.subr.mxu0 0.0
  %799 = vmatpush2.xpose.msra.mxu0 0.0
  %800 = vmatprep.subr.mxu0 0.0
  %801 = vmatpush2.xpose.msra.mxu0 0.0
  %802 = vmatprep.subr.mxu0 0.0
  %803 = vmatpush2.xpose.msra.mxu0 0.0
  %804 = vmatprep.subr.mxu0 0.0
  %805 = vmatpush2.xpose.msra.mxu0 0.0
  %806 = vmatprep.subr.mxu0 0.0
  %807 = vmatpush2.xpose.msra.mxu0 0.0
  %808 = vmatprep.subr.mxu0 0.0
  %809 = vmatpush2.xpose.msra.mxu0 0.0
  %810 = vmatprep.subr.mxu0 0.0
  %811 = vmatpush2.xpose.msra.mxu0 0.0
  %812 = vmatprep.subr.mxu0 0.0
  %813 = vmatpush2.xpose.msra.mxu0 0.0
  %814 = vmatprep.subr.mxu0 0.0
  %815 = vmatpush2.xpose.msra.mxu0 0.0
  %816 = vmatprep.subr.mxu0 0.0
  %817 = vmatpush2.xpose.msra.mxu0 0.0
  %818 = vmatprep.subr.mxu0 0.0
  %819 = vmatpush2.xpose.msra.mxu0 0.0
  %820 = vmatprep.subr.mxu0 0.0
  %821 = vmatpush2.xpose.msra.mxu0 0.0
  %822 = vmatprep.subr.mxu0 0.0
  %823 = vmatpush2.xpose.msra.mxu0 0.0
  %824 = vmatprep.mubr.f32.mxu0 0.0
  %825 = vmatmul.mubr.f32.gmra.mxu0 %v758
  %v826 = vpop.f32.mrf.mxu0
  %v827 = vadd.f32 0.0, %v826
  %v828 = vpop.f32.mrf.mxu0
  %829 = vdwg.mxu0
  %v831 = vsel %vm359, %v50, 0
  %833 = vmatprep.subr.mxu0 0.0
  %834 = vmatpush1.xpose.msra.mxu0 0.0
  %835 = vmatprep.subr.mxu0 0.0
  %836 = vmatpush1.xpose.msra.mxu0 0.0
  %837 = vmatprep.subr.mxu0 0.0
  %838 = vmatpush1.xpose.msra.mxu0 0.0
  %839 = vmatprep.subr.mxu0 0.0
  %840 = vmatpush1.xpose.msra.mxu0 0.0
  %841 = vmatprep.subr.mxu0 0.0
  %842 = vmatpush1.xpose.msra.mxu0 0.0
  %843 = vmatprep.subr.mxu0 0.0
  %844 = vmatpush1.xpose.msra.mxu0 0.0
  %845 = vmatprep.subr.mxu0 0.0
  %846 = vmatpush1.xpose.msra.mxu0 0.0
  %847 = vmatprep.subr.mxu0 0.0
  %848 = vmatpush1.xpose.msra.mxu0 0.0
  %849 = vmatprep.subr.mxu0 0.0
  %850 = vmatpush1.xpose.msra.mxu0 0.0
  %851 = vmatprep.subr.mxu0 0.0
  %852 = vmatpush1.xpose.msra.mxu0 0.0
  %853 = vmatprep.subr.mxu0 0.0
  %854 = vmatpush1.xpose.msra.mxu0 0.0
  %855 = vmatprep.subr.mxu0 0.0
  %856 = vmatpush1.xpose.msra.mxu0 0.0
  %857 = vmatprep.subr.mxu0 0.0
  %858 = vmatpush1.xpose.msra.mxu0 0.0
  %859 = vmatprep.subr.mxu0 0.0
  %860 = vmatpush1.xpose.msra.mxu0 0.0
  %861 = vmatprep.subr.mxu0 0.0
  %862 = vmatpush1.xpose.msra.mxu0 %v526
  %863 = vmatprep.subr.mxu0 0.0
  %864 = vmatpush1.xpose.msra.mxu0 %v523
  %865 = vmatprep.subr.mxu0 0.0
  %866 = vmatpush2.xpose.msra.mxu0 0.0
  %867 = vmatprep.subr.mxu0 0.0
  %868 = vmatpush2.xpose.msra.mxu0 0.0
  %869 = vmatprep.subr.mxu0 0.0
  %870 = vmatpush2.xpose.msra.mxu0 0.0
  %871 = vmatprep.subr.mxu0 0.0
  %872 = vmatpush2.xpose.msra.mxu0 0.0
  %873 = vmatprep.subr.mxu0 0.0
  %874 = vmatpush2.xpose.msra.mxu0 0.0
  %875 = vmatprep.subr.mxu0 0.0
  %876 = vmatpush2.xpose.msra.mxu0 0.0
  %877 = vmatprep.subr.mxu0 0.0
  %878 = vmatpush2.xpose.msra.mxu0 0.0
  %879 = vmatprep.subr.mxu0 0.0
  %880 = vmatpush2.xpose.msra.mxu0 0.0
  %881 = vmatprep.subr.mxu0 0.0
  %882 = vmatpush2.xpose.msra.mxu0 0.0
  %883 = vmatprep.subr.mxu0 0.0
  %884 = vmatpush2.xpose.msra.mxu0 0.0
  %885 = vmatprep.subr.mxu0 0.0
  %886 = vmatpush2.xpose.msra.mxu0 0.0
  %887 = vmatprep.subr.mxu0 0.0
  %888 = vmatpush2.xpose.msra.mxu0 0.0
  %889 = vmatprep.subr.mxu0 0.0
  %890 = vmatpush2.xpose.msra.mxu0 0.0
  %891 = vmatprep.subr.mxu0 0.0
  %892 = vmatpush2.xpose.msra.mxu0 0.0
  %893 = vmatprep.subr.mxu0 0.0
  %894 = vmatpush2.xpose.msra.mxu0 0.0
  %895 = vmatprep.subr.mxu0 0.0
  %896 = vmatpush2.xpose.msra.mxu0 0.0
  %897 = vmatprep.mubr.f32.mxu0 0.0
  %898 = vmatmul.mubr.f32.gmra.mxu0 %v831
  %v899 = vpop.f32.mrf.mxu0
  %v900 = vadd.f32 0.0, %v899
  %v901 = vpop.f32.mrf.mxu0
  %902 = vdwg.mxu0
  %v904 = vsel %vm359, %v51, 0
  %906 = vmatprep.subr.mxu0 0.0
  %907 = vmatpush1.xpose.msra.mxu0 0.0
  %908 = vmatprep.subr.mxu0 0.0
  %909 = vmatpush1.xpose.msra.mxu0 0.0
  %910 = vmatprep.subr.mxu0 0.0
  %911 = vmatpush1.xpose.msra.mxu0 0.0
  %912 = vmatprep.subr.mxu0 0.0
  %913 = vmatpush1.xpose.msra.mxu0 0.0
  %914 = vmatprep.subr.mxu0 0.0
  %915 = vmatpush1.xpose.msra.mxu0 0.0
  %916 = vmatprep.subr.mxu0 0.0
  %917 = vmatpush1.xpose.msra.mxu0 0.0
  %918 = vmatprep.subr.mxu0 0.0
  %919 = vmatpush1.xpose.msra.mxu0 0.0
  %920 = vmatprep.subr.mxu0 0.0
  %921 = vmatpush1.xpose.msra.mxu0 0.0
  %922 = vmatprep.subr.mxu0 0.0
  %923 = vmatpush1.xpose.msra.mxu0 0.0
  %924 = vmatprep.subr.mxu0 0.0
  %925 = vmatpush1.xpose.msra.mxu0 0.0
  %926 = vmatprep.subr.mxu0 0.0
  %927 = vmatpush1.xpose.msra.mxu0 0.0
  %928 = vmatprep.subr.mxu0 0.0
  %929 = vmatpush1.xpose.msra.mxu0 0.0
  %930 = vmatprep.subr.mxu0 0.0
  %931 = vmatpush1.xpose.msra.mxu0 0.0
  %932 = vmatprep.subr.mxu0 0.0
  %933 = vmatpush1.xpose.msra.mxu0 0.0
  %934 = vmatprep.subr.mxu0 0.0
  %935 = vmatpush1.xpose.msra.mxu0 %v607
  %936 = vmatprep.subr.mxu0 0.0
  %937 = vmatpush1.xpose.msra.mxu0 %v604
  %938 = vmatprep.subr.mxu0 0.0
  %939 = vmatpush2.xpose.msra.mxu0 0.0
  %940 = vmatprep.subr.mxu0 0.0
  %941 = vmatpush2.xpose.msra.mxu0 0.0
  %942 = vmatprep.subr.mxu0 0.0
  %943 = vmatpush2.xpose.msra.mxu0 0.0
  %944 = vmatprep.subr.mxu0 0.0
  %945 = vmatpush2.xpose.msra.mxu0 0.0
  %946 = vmatprep.subr.mxu0 0.0
  %947 = vmatpush2.xpose.msra.mxu0 0.0
  %948 = vmatprep.subr.mxu0 0.0
  %949 = vmatpush2.xpose.msra.mxu0 0.0
  %950 = vmatprep.subr.mxu0 0.0
  %951 = vmatpush2.xpose.msra.mxu0 0.0
  %952 = vmatprep.subr.mxu0 0.0
  %953 = vmatpush2.xpose.msra.mxu0 0.0
  %954 = vmatprep.subr.mxu0 0.0
  %955 = vmatpush2.xpose.msra.mxu0 0.0
  %956 = vmatprep.subr.mxu0 0.0
  %957 = vmatpush2.xpose.msra.mxu0 0.0
  %958 = vmatprep.subr.mxu0 0.0
  %959 = vmatpush2.xpose.msra.mxu0 0.0
  %960 = vmatprep.subr.mxu0 0.0
  %961 = vmatpush2.xpose.msra.mxu0 0.0
  %962 = vmatprep.subr.mxu0 0.0
  %963 = vmatpush2.xpose.msra.mxu0 0.0
  %964 = vmatprep.subr.mxu0 0.0
  %965 = vmatpush2.xpose.msra.mxu0 0.0
  %966 = vmatprep.subr.mxu0 0.0
  %967 = vmatpush2.xpose.msra.mxu0 0.0
  %968 = vmatprep.subr.mxu0 0.0
  %969 = vmatpush2.xpose.msra.mxu0 0.0
  %970 = vmatprep.mubr.f32.mxu0 0.0
  %971 = vmatmul.mubr.f32.gmra.mxu0 %v904
  %v972 = vpop.f32.mrf.mxu0
  %v973 = vadd.f32 0.0, %v972
  %v974 = vpop.f32.mrf.mxu0
  %975 = vdwg.mxu0
  %977 = vset.pattern.permute.xlu0 0
  %978 = vperm.xlu0 %977, %v433
  %v979 = vpop.permute.xlu0 %978
  %982 = vset.pattern.permute.xlu0 0
  %983 = vperm.xlu0 %982, %v438
  %v984 = vpop.permute.xlu0 %983
  %987 = vset.pattern.permute.xlu0 0
  %988 = vperm.xlu0 %987, %v514
  %v989 = vpop.permute.xlu0 %988
  %992 = vset.pattern.permute.xlu0 0
  %993 = vperm.xlu0 %992, %v519
  %v994 = vpop.permute.xlu0 %993
  %997 = vset.pattern.permute.xlu0 0
  %998 = vperm.xlu0 %997, %v595
  %v999 = vpop.permute.xlu0 %998
  %1002 = vset.pattern.permute.xlu0 0
  %1003 = vperm.xlu0 %1002, %v600
  %v1004 = vpop.permute.xlu0 %1003
  %1007 = vset.pattern.permute.xlu0 0
  %1008 = vperm.xlu0 %1007, %v676
  %v1009 = vpop.permute.xlu0 %1008
  %1012 = vset.pattern.permute.xlu0 0
  %1013 = vperm.xlu0 %1012, %v681
  %v1014 = vpop.permute.xlu0 %1013
  %v1016 = vlaneseq
  %v1017 = vshrl.u32 %v1016, 7
  %v1018 = vsub.s32 0, %v1017
  %v1019 = vrot.slane %v754, %v1018
  %v1020 = vlaneseq
  %v1021 = vshrl.u32 %v1020, 7
  %v1022 = vsub.s32 0, %v1021
  %v1023 = vrot.slane %v827, %v1022
  %v1024 = vlaneseq
  %v1025 = vshrl.u32 %v1024, 7
  %v1026 = vsub.s32 0, %v1025
  %v1027 = vrot.slane %v900, %v1026
  %v1028 = vlaneseq
  %v1029 = vshrl.u32 %v1028, 7
  %v1030 = vsub.s32 0, %v1029
  %v1031 = vrot.slane %v973, %v1030
  %v1032 = vadd.f32 %v979, %v1019
  %v1033 = vadd.f32 %v984, %v1019
  %v1034 = vadd.f32 %v989, %v1023
  %v1035 = vadd.f32 %v994, %v1023
  %v1036 = vadd.f32 %v999, %v1027
  %v1037 = vadd.f32 %v1004, %v1027
  %v1038 = vadd.f32 %v1009, %v1031
  %v1039 = vadd.f32 %v1014, %v1031
  %v1040 = vmul.f32 %v1032, 0.2
  %v1041 = vmul.f32 %v1033, 0.2
  %v1042 = vmul.f32 %v1034, 0.2
  %v1043 = vmul.f32 %v1035, 0.2
  %v1044 = vmul.f32 %v1036, 0.2
  %v1045 = vmul.f32 %v1037, 0.2
  %v1046 = vmul.f32 %v1038, 0.2
  %v1047 = vmul.f32 %v1039, 0.2
  %v1048 = vmax.f32 %v1032, %v1040
  %v1049 = vmax.f32 %v1033, %v1041
  %v1050 = vmax.f32 %v1034, %v1042
  %v1051 = vmax.f32 %v1035, %v1043
  %v1052 = vmax.f32 %v1036, %v1044
  %v1053 = vmax.f32 %v1037, %v1045
  %v1054 = vmax.f32 %v1038, %v1046
  %v1055 = vmax.f32 %v1039, %v1047
  %v1056 = vadd.f32 %v1048, %v16
  %v1057 = vadd.f32 %v1049, %v17
  %v1058 = vadd.f32 %v1050, %v18
  %v1059 = vadd.f32 %v1051, %v19
  %v1060 = vadd.f32 %v1052, %v20
  %v1061 = vadd.f32 %v1053, %v21
  %v1062 = vadd.f32 %v1054, %v22
  %v1063 = vadd.f32 %v1055, %v23
  %vm1064 = vcmask 130048
  %v1065 = vsel %vm1064, %v1056, -inf
  %1066 = vmax.xlane.f32.xlu0 %v1065
  %v1067 = vpop.xlane.xlu0 %1066
  %v1068 = vsel %vm1064, %v1057, -inf
  %1069 = vmax.xlane.f32.xlu0 %v1068
  %v1070 = vpop.xlane.xlu0 %1069
  %v1071 = vsel %vm1064, %v1058, -inf
  %1072 = vmax.xlane.f32.xlu0 %v1071
  %v1073 = vpop.xlane.xlu0 %1072
  %v1074 = vsel %vm1064, %v1059, -inf
  %1075 = vmax.xlane.f32.xlu0 %v1074
  %v1076 = vpop.xlane.xlu0 %1075
  %v1077 = vsel %vm1064, %v1060, -inf
  %1078 = vmax.xlane.f32.xlu0 %v1077
  %v1079 = vpop.xlane.xlu0 %1078
  %v1080 = vsel %vm1064, %v1061, -inf
  %1081 = vmax.xlane.f32.xlu0 %v1080
  %v1082 = vpop.xlane.xlu0 %1081
  %v1083 = vsel %vm1064, %v1062, -inf
  %1084 = vmax.xlane.f32.xlu0 %v1083
  %v1085 = vpop.xlane.xlu0 %1084
  %v1086 = vsel %vm1064, %v1063, -inf
  %1087 = vmax.xlane.f32.xlu0 %v1086
  %v1088 = vpop.xlane.xlu0 %1087
  %v1089 = vsub.f32 %v1056, %v1067
  %v1090 = vsub.f32 %v1057, %v1070
  %v1091 = vsub.f32 %v1058, %v1073
  %v1092 = vsub.f32 %v1059, %v1076
  %v1093 = vsub.f32 %v1060, %v1079
  %v1094 = vsub.f32 %v1061, %v1082
  %v1095 = vsub.f32 %v1062, %v1085
  %v1096 = vsub.f32 %v1063, %v1088
  %v1097 = vmul.f32 %v1089, 1.442695
  %v1098 = vpow.pop %v1097
  %v1099 = vmul.f32 %v1090, 1.442695
  %v1100 = vpow.pop %v1099
  %v1101 = vmul.f32 %v1091, 1.442695
  %v1102 = vpow.pop %v1101
  %v1103 = vmul.f32 %v1092, 1.442695
  %v1104 = vpow.pop %v1103
  %v1105 = vmul.f32 %v1093, 1.442695
  %v1106 = vpow.pop %v1105
  %v1107 = vmul.f32 %v1094, 1.442695
  %v1108 = vpow.pop %v1107
  %v1109 = vmul.f32 %v1095, 1.442695
  %v1110 = vpow.pop %v1109
  %v1111 = vmul.f32 %v1096, 1.442695
  %v1112 = vpow.pop %v1111
  %v1113 = vsel %vm1064, %v1098, 0.0
  %1114 = vadd.xlane.f32.xlu0 %v1113
  %v1115 = vpop.xlane.xlu0 %1114
  %v1116 = vsel %vm1064, %v1100, 0.0
  %1117 = vadd.xlane.f32.xlu0 %v1116
  %v1118 = vpop.xlane.xlu0 %1117
  %v1119 = vsel %vm1064, %v1102, 0.0
  %1120 = vadd.xlane.f32.xlu0 %v1119
  %v1121 = vpop.xlane.xlu0 %1120
  %v1122 = vsel %vm1064, %v1104, 0.0
  %1123 = vadd.xlane.f32.xlu0 %v1122
  %v1124 = vpop.xlane.xlu0 %1123
  %v1125 = vsel %vm1064, %v1106, 0.0
  %1126 = vadd.xlane.f32.xlu0 %v1125
  %v1127 = vpop.xlane.xlu0 %1126
  %v1128 = vsel %vm1064, %v1108, 0.0
  %1129 = vadd.xlane.f32.xlu0 %v1128
  %v1130 = vpop.xlane.xlu0 %1129
  %v1131 = vsel %vm1064, %v1110, 0.0
  %1132 = vadd.xlane.f32.xlu0 %v1131
  %v1133 = vpop.xlane.xlu0 %1132
  %v1134 = vsel %vm1064, %v1112, 0.0
  %1135 = vadd.xlane.f32.xlu0 %v1134
  %v1136 = vpop.xlane.xlu0 %1135
  %v1137 = vrcp.pop %v1115
  %v1138 = vmul.f32 1.0, %v1137
  %v1139 = vrcp.pop %v1118
  %v1140 = vmul.f32 1.0, %v1139
  %v1141 = vrcp.pop %v1121
  %v1142 = vmul.f32 1.0, %v1141
  %v1143 = vrcp.pop %v1124
  %v1144 = vmul.f32 1.0, %v1143
  %v1145 = vrcp.pop %v1127
  %v1146 = vmul.f32 1.0, %v1145
  %v1147 = vrcp.pop %v1130
  %v1148 = vmul.f32 1.0, %v1147
  %v1149 = vrcp.pop %v1133
  %v1150 = vmul.f32 1.0, %v1149
  %v1151 = vrcp.pop %v1136
  %v1152 = vmul.f32 1.0, %v1151
  %v1153 = vmul.f32 %v1098, %v1138
  %v1154 = vmul.f32 %v1100, %v1140
  %v1155 = vmul.f32 %v1102, %v1142
  %v1156 = vmul.f32 %v1104, %v1144
  %v1157 = vmul.f32 %v1106, %v1146
  %v1158 = vmul.f32 %v1108, %v1148
  %v1159 = vmul.f32 %v1110, %v1150
  %v1160 = vmul.f32 %v1112, %v1152
  %v1162 = vsel %vm1064, %v1153, 0
  %v1165 = vsel %vm1064, %v1154, 0
  %1167 = vmatprep.subr.mxu0 0.0
  %1168 = vmatpush1.msra.mxu0 0.0
  %1169 = vmatprep.subr.mxu0 0.0
  %1170 = vmatpush1.msra.mxu0 0.0
  %1171 = vmatprep.subr.mxu0 0.0
  %1172 = vmatpush1.msra.mxu0 0.0
  %1173 = vmatprep.subr.mxu0 0.0
  %1174 = vmatpush1.msra.mxu0 0.0
  %1175 = vmatprep.subr.mxu0 0.0
  %1176 = vmatpush1.msra.mxu0 0.0
  %1177 = vmatprep.subr.mxu0 0.0
  %1178 = vmatpush1.msra.mxu0 0.0
  %1179 = vmatprep.subr.mxu0 0.0
  %1180 = vmatpush1.msra.mxu0 0.0
  %1181 = vmatprep.subr.mxu0 0.0
  %1182 = vmatpush1.msra.mxu0 0.0
  %1183 = vmatprep.subr.mxu0 0.0
  %1184 = vmatpush1.msra.mxu0 0.0
  %1185 = vmatprep.subr.mxu0 0.0
  %1186 = vmatpush1.msra.mxu0 0.0
  %1187 = vmatprep.subr.mxu0 0.0
  %1188 = vmatpush1.msra.mxu0 0.0
  %1189 = vmatprep.subr.mxu0 0.0
  %1190 = vmatpush1.msra.mxu0 0.0
  %1191 = vmatprep.subr.mxu0 0.0
  %1192 = vmatpush1.msra.mxu0 0.0
  %1193 = vmatprep.subr.mxu0 0.0
  %1194 = vmatpush1.msra.mxu0 0.0
  %1195 = vmatprep.subr.mxu0 0.0
  %1196 = vmatpush1.msra.mxu0 %v131
  %1197 = vmatprep.subr.mxu0 0.0
  %1198 = vmatpush1.msra.mxu0 %v126
  %1199 = vmatprep.subr.mxu0 0.0
  %1200 = vmatpush2.msra.mxu0 0.0
  %1201 = vmatprep.subr.mxu0 0.0
  %1202 = vmatpush2.msra.mxu0 0.0
  %1203 = vmatprep.subr.mxu0 0.0
  %1204 = vmatpush2.msra.mxu0 0.0
  %1205 = vmatprep.subr.mxu0 0.0
  %1206 = vmatpush2.msra.mxu0 0.0
  %1207 = vmatprep.subr.mxu0 0.0
  %1208 = vmatpush2.msra.mxu0 0.0
  %1209 = vmatprep.subr.mxu0 0.0
  %1210 = vmatpush2.msra.mxu0 0.0
  %1211 = vmatprep.subr.mxu0 0.0
  %1212 = vmatpush2.msra.mxu0 0.0
  %1213 = vmatprep.subr.mxu0 0.0
  %1214 = vmatpush2.msra.mxu0 0.0
  %1215 = vmatprep.subr.mxu0 0.0
  %1216 = vmatpush2.msra.mxu0 0.0
  %1217 = vmatprep.subr.mxu0 0.0
  %1218 = vmatpush2.msra.mxu0 0.0
  %1219 = vmatprep.subr.mxu0 0.0
  %1220 = vmatpush2.msra.mxu0 0.0
  %1221 = vmatprep.subr.mxu0 0.0
  %1222 = vmatpush2.msra.mxu0 0.0
  %1223 = vmatprep.subr.mxu0 0.0
  %1224 = vmatpush2.msra.mxu0 0.0
  %1225 = vmatprep.subr.mxu0 0.0
  %1226 = vmatpush2.msra.mxu0 0.0
  %1227 = vmatprep.subr.mxu0 0.0
  %1228 = vmatpush2.msra.mxu0 0.0
  %1229 = vmatprep.subr.mxu0 0.0
  %1230 = vmatpush2.msra.mxu0 0.0
  %1231 = vmatprep.mubr.f32.mxu0 0.0
  %1232 = vmatmul.mubr.f32.gmra.mxu0 %v1162
  %v1233 = vpop.f32.mrf.mxu0
  %v1234 = vadd.f32 0.0, %v1233
  %v1235 = vpop.f32.mrf.mxu0
  %1236 = vmatprep.mubr.f32.mxu0 0.0
  %1237 = vmatmul.mubr.f32.gmra.mxu0 %v1165
  %v1238 = vpop.f32.mrf.mxu0
  %v1239 = vadd.f32 0.0, %v1238
  %v1240 = vpop.f32.mrf.mxu0
  %1241 = vdwg.mxu0
  %v1243 = vsel %vm1064, %v1155, 0
  %v1246 = vsel %vm1064, %v1156, 0
  %1248 = vmatprep.subr.mxu0 0.0
  %1249 = vmatpush1.msra.mxu0 0.0
  %1250 = vmatprep.subr.mxu0 0.0
  %1251 = vmatpush1.msra.mxu0 0.0
  %1252 = vmatprep.subr.mxu0 0.0
  %1253 = vmatpush1.msra.mxu0 0.0
  %1254 = vmatprep.subr.mxu0 0.0
  %1255 = vmatpush1.msra.mxu0 0.0
  %1256 = vmatprep.subr.mxu0 0.0
  %1257 = vmatpush1.msra.mxu0 0.0
  %1258 = vmatprep.subr.mxu0 0.0
  %1259 = vmatpush1.msra.mxu0 0.0
  %1260 = vmatprep.subr.mxu0 0.0
  %1261 = vmatpush1.msra.mxu0 0.0
  %1262 = vmatprep.subr.mxu0 0.0
  %1263 = vmatpush1.msra.mxu0 0.0
  %1264 = vmatprep.subr.mxu0 0.0
  %1265 = vmatpush1.msra.mxu0 0.0
  %1266 = vmatprep.subr.mxu0 0.0
  %1267 = vmatpush1.msra.mxu0 0.0
  %1268 = vmatprep.subr.mxu0 0.0
  %1269 = vmatpush1.msra.mxu0 0.0
  %1270 = vmatprep.subr.mxu0 0.0
  %1271 = vmatpush1.msra.mxu0 0.0
  %1272 = vmatprep.subr.mxu0 0.0
  %1273 = vmatpush1.msra.mxu0 0.0
  %1274 = vmatprep.subr.mxu0 0.0
  %1275 = vmatpush1.msra.mxu0 0.0
  %1276 = vmatprep.subr.mxu0 0.0
  %1277 = vmatpush1.msra.mxu0 %v206
  %1278 = vmatprep.subr.mxu0 0.0
  %1279 = vmatpush1.msra.mxu0 %v201
  %1280 = vmatprep.subr.mxu0 0.0
  %1281 = vmatpush2.msra.mxu0 0.0
  %1282 = vmatprep.subr.mxu0 0.0
  %1283 = vmatpush2.msra.mxu0 0.0
  %1284 = vmatprep.subr.mxu0 0.0
  %1285 = vmatpush2.msra.mxu0 0.0
  %1286 = vmatprep.subr.mxu0 0.0
  %1287 = vmatpush2.msra.mxu0 0.0
  %1288 = vmatprep.subr.mxu0 0.0
  %1289 = vmatpush2.msra.mxu0 0.0
  %1290 = vmatprep.subr.mxu0 0.0
  %1291 = vmatpush2.msra.mxu0 0.0
  %1292 = vmatprep.subr.mxu0 0.0
  %1293 = vmatpush2.msra.mxu0 0.0
  %1294 = vmatprep.subr.mxu0 0.0
  %1295 = vmatpush2.msra.mxu0 0.0
  %1296 = vmatprep.subr.mxu0 0.0
  %1297 = vmatpush2.msra.mxu0 0.0
  %1298 = vmatprep.subr.mxu0 0.0
  %1299 = vmatpush2.msra.mxu0 0.0
  %1300 = vmatprep.subr.mxu0 0.0
  %1301 = vmatpush2.msra.mxu0 0.0
  %1302 = vmatprep.subr.mxu0 0.0
  %1303 = vmatpush2.msra.mxu0 0.0
  %1304 = vmatprep.subr.mxu0 0.0
  %1305 = vmatpush2.msra.mxu0 0.0
  %1306 = vmatprep.subr.mxu0 0.0
  %1307 = vmatpush2.msra.mxu0 0.0
  %1308 = vmatprep.subr.mxu0 0.0
  %1309 = vmatpush2.msra.mxu0 0.0
  %1310 = vmatprep.subr.mxu0 0.0
  %1311 = vmatpush2.msra.mxu0 0.0
  %1312 = vmatprep.mubr.f32.mxu0 0.0
  %1313 = vmatmul.mubr.f32.gmra.mxu0 %v1243
  %v1314 = vpop.f32.mrf.mxu0
  %v1315 = vadd.f32 0.0, %v1314
  %v1316 = vpop.f32.mrf.mxu0
  %1317 = vmatprep.mubr.f32.mxu0 0.0
  %1318 = vmatmul.mubr.f32.gmra.mxu0 %v1246
  %v1319 = vpop.f32.mrf.mxu0
  %v1320 = vadd.f32 0.0, %v1319
  %v1321 = vpop.f32.mrf.mxu0
  %1322 = vdwg.mxu0
  %v1324 = vsel %vm1064, %v1157, 0
  %v1327 = vsel %vm1064, %v1158, 0
  %1329 = vmatprep.subr.mxu0 0.0
  %1330 = vmatpush1.msra.mxu0 0.0
  %1331 = vmatprep.subr.mxu0 0.0
  %1332 = vmatpush1.msra.mxu0 0.0
  %1333 = vmatprep.subr.mxu0 0.0
  %1334 = vmatpush1.msra.mxu0 0.0
  %1335 = vmatprep.subr.mxu0 0.0
  %1336 = vmatpush1.msra.mxu0 0.0
  %1337 = vmatprep.subr.mxu0 0.0
  %1338 = vmatpush1.msra.mxu0 0.0
  %1339 = vmatprep.subr.mxu0 0.0
  %1340 = vmatpush1.msra.mxu0 0.0
  %1341 = vmatprep.subr.mxu0 0.0
  %1342 = vmatpush1.msra.mxu0 0.0
  %1343 = vmatprep.subr.mxu0 0.0
  %1344 = vmatpush1.msra.mxu0 0.0
  %1345 = vmatprep.subr.mxu0 0.0
  %1346 = vmatpush1.msra.mxu0 0.0
  %1347 = vmatprep.subr.mxu0 0.0
  %1348 = vmatpush1.msra.mxu0 0.0
  %1349 = vmatprep.subr.mxu0 0.0
  %1350 = vmatpush1.msra.mxu0 0.0
  %1351 = vmatprep.subr.mxu0 0.0
  %1352 = vmatpush1.msra.mxu0 0.0
  %1353 = vmatprep.subr.mxu0 0.0
  %1354 = vmatpush1.msra.mxu0 0.0
  %1355 = vmatprep.subr.mxu0 0.0
  %1356 = vmatpush1.msra.mxu0 0.0
  %1357 = vmatprep.subr.mxu0 0.0
  %1358 = vmatpush1.msra.mxu0 %v281
  %1359 = vmatprep.subr.mxu0 0.0
  %1360 = vmatpush1.msra.mxu0 %v276
  %1361 = vmatprep.subr.mxu0 0.0
  %1362 = vmatpush2.msra.mxu0 0.0
  %1363 = vmatprep.subr.mxu0 0.0
  %1364 = vmatpush2.msra.mxu0 0.0
  %1365 = vmatprep.subr.mxu0 0.0
  %1366 = vmatpush2.msra.mxu0 0.0
  %1367 = vmatprep.subr.mxu0 0.0
  %1368 = vmatpush2.msra.mxu0 0.0
  %1369 = vmatprep.subr.mxu0 0.0
  %1370 = vmatpush2.msra.mxu0 0.0
  %1371 = vmatprep.subr.mxu0 0.0
  %1372 = vmatpush2.msra.mxu0 0.0
  %1373 = vmatprep.subr.mxu0 0.0
  %1374 = vmatpush2.msra.mxu0 0.0
  %1375 = vmatprep.subr.mxu0 0.0
  %1376 = vmatpush2.msra.mxu0 0.0
  %1377 = vmatprep.subr.mxu0 0.0
  %1378 = vmatpush2.msra.mxu0 0.0
  %1379 = vmatprep.subr.mxu0 0.0
  %1380 = vmatpush2.msra.mxu0 0.0
  %1381 = vmatprep.subr.mxu0 0.0
  %1382 = vmatpush2.msra.mxu0 0.0
  %1383 = vmatprep.subr.mxu0 0.0
  %1384 = vmatpush2.msra.mxu0 0.0
  %1385 = vmatprep.subr.mxu0 0.0
  %1386 = vmatpush2.msra.mxu0 0.0
  %1387 = vmatprep.subr.mxu0 0.0
  %1388 = vmatpush2.msra.mxu0 0.0
  %1389 = vmatprep.subr.mxu0 0.0
  %1390 = vmatpush2.msra.mxu0 0.0
  %1391 = vmatprep.subr.mxu0 0.0
  %1392 = vmatpush2.msra.mxu0 0.0
  %1393 = vmatprep.mubr.f32.mxu0 0.0
  %1394 = vmatmul.mubr.f32.gmra.mxu0 %v1324
  %v1395 = vpop.f32.mrf.mxu0
  %v1396 = vadd.f32 0.0, %v1395
  %v1397 = vpop.f32.mrf.mxu0
  %1398 = vmatprep.mubr.f32.mxu0 0.0
  %1399 = vmatmul.mubr.f32.gmra.mxu0 %v1327
  %v1400 = vpop.f32.mrf.mxu0
  %v1401 = vadd.f32 0.0, %v1400
  %v1402 = vpop.f32.mrf.mxu0
  %1403 = vdwg.mxu0
  %v1405 = vsel %vm1064, %v1159, 0
  %v1408 = vsel %vm1064, %v1160, 0
  %1410 = vmatprep.subr.mxu0 0.0
  %1411 = vmatpush1.msra.mxu0 0.0
  %1412 = vmatprep.subr.mxu0 0.0
  %1413 = vmatpush1.msra.mxu0 0.0
  %1414 = vmatprep.subr.mxu0 0.0
  %1415 = vmatpush1.msra.mxu0 0.0
  %1416 = vmatprep.subr.mxu0 0.0
  %1417 = vmatpush1.msra.mxu0 0.0
  %1418 = vmatprep.subr.mxu0 0.0
  %1419 = vmatpush1.msra.mxu0 0.0
  %1420 = vmatprep.subr.mxu0 0.0
  %1421 = vmatpush1.msra.mxu0 0.0
  %1422 = vmatprep.subr.mxu0 0.0
  %1423 = vmatpush1.msra.mxu0 0.0
  %1424 = vmatprep.subr.mxu0 0.0
  %1425 = vmatpush1.msra.mxu0 0.0
  %1426 = vmatprep.subr.mxu0 0.0
  %1427 = vmatpush1.msra.mxu0 0.0
  %1428 = vmatprep.subr.mxu0 0.0
  %1429 = vmatpush1.msra.mxu0 0.0
  %1430 = vmatprep.subr.mxu0 0.0
  %1431 = vmatpush1.msra.mxu0 0.0
  %1432 = vmatprep.subr.mxu0 0.0
  %1433 = vmatpush1.msra.mxu0 0.0
  %1434 = vmatprep.subr.mxu0 0.0
  %1435 = vmatpush1.msra.mxu0 0.0
  %1436 = vmatprep.subr.mxu0 0.0
  %1437 = vmatpush1.msra.mxu0 0.0
  %1438 = vmatprep.subr.mxu0 0.0
  %1439 = vmatpush1.msra.mxu0 %v356
  %1440 = vmatprep.subr.mxu0 0.0
  %1441 = vmatpush1.msra.mxu0 %v351
  %1442 = vmatprep.subr.mxu0 0.0
  %1443 = vmatpush2.msra.mxu0 0.0
  %1444 = vmatprep.subr.mxu0 0.0
  %1445 = vmatpush2.msra.mxu0 0.0
  %1446 = vmatprep.subr.mxu0 0.0
  %1447 = vmatpush2.msra.mxu0 0.0
  %1448 = vmatprep.subr.mxu0 0.0
  %1449 = vmatpush2.msra.mxu0 0.0
  %1450 = vmatprep.subr.mxu0 0.0
  %1451 = vmatpush2.msra.mxu0 0.0
  %1452 = vmatprep.subr.mxu0 0.0
  %1453 = vmatpush2.msra.mxu0 0.0
  %1454 = vmatprep.subr.mxu0 0.0
  %1455 = vmatpush2.msra.mxu0 0.0
  %1456 = vmatprep.subr.mxu0 0.0
  %1457 = vmatpush2.msra.mxu0 0.0
  %1458 = vmatprep.subr.mxu0 0.0
  %1459 = vmatpush2.msra.mxu0 0.0
  %1460 = vmatprep.subr.mxu0 0.0
  %1461 = vmatpush2.msra.mxu0 0.0
  %1462 = vmatprep.subr.mxu0 0.0
  %1463 = vmatpush2.msra.mxu0 0.0
  %1464 = vmatprep.subr.mxu0 0.0
  %1465 = vmatpush2.msra.mxu0 0.0
  %1466 = vmatprep.subr.mxu0 0.0
  %1467 = vmatpush2.msra.mxu0 0.0
  %1468 = vmatprep.subr.mxu0 0.0
  %1469 = vmatpush2.msra.mxu0 0.0
  %1470 = vmatprep.subr.mxu0 0.0
  %1471 = vmatpush2.msra.mxu0 0.0
  %1472 = vmatprep.subr.mxu0 0.0
  %1473 = vmatpush2.msra.mxu0 0.0
  %1474 = vmatprep.mubr.f32.mxu0 0.0
  %1475 = vmatmul.mubr.f32.gmra.mxu0 %v1405
  %v1476 = vpop.f32.mrf.mxu0
  %v1477 = vadd.f32 0.0, %v1476
  %v1478 = vpop.f32.mrf.mxu0
  %1479 = vmatprep.mubr.f32.mxu0 0.0
  %1480 = vmatmul.mubr.f32.gmra.mxu0 %v1408
  %v1481 = vpop.f32.mrf.mxu0
  %v1482 = vadd.f32 0.0, %v1481
  %v1483 = vpop.f32.mrf.mxu0
  %1484 = vdwg.mxu0
  %v1486 = vsel %vm359, %v1234, 0
  %v1489 = vsel %vm359, %v1239, 0
  %1491 = vmatprep.subr.mxu0 0.0
  %1492 = vmatpush1.msra.mxu0 0.0
  %1493 = vmatprep.subr.mxu0 0.0
  %1494 = vmatpush1.msra.mxu0 0.0
  %1495 = vmatprep.subr.mxu0 0.0
  %1496 = vmatpush1.msra.mxu0 0.0
  %1497 = vmatprep.subr.mxu0 0.0
  %1498 = vmatpush1.msra.mxu0 0.0
  %1499 = vmatprep.subr.mxu0 0.0
  %1500 = vmatpush1.msra.mxu0 0.0
  %1501 = vmatprep.subr.mxu0 0.0
  %1502 = vmatpush1.msra.mxu0 0.0
  %1503 = vmatprep.subr.mxu0 0.0
  %1504 = vmatpush1.msra.mxu0 0.0
  %1505 = vmatprep.subr.mxu0 0.0
  %1506 = vmatpush1.msra.mxu0 0.0
  %1507 = vmatprep.subr.mxu0 0.0
  %1508 = vmatpush1.msra.mxu0 0.0
  %1509 = vmatprep.subr.mxu0 0.0
  %1510 = vmatpush1.msra.mxu0 0.0
  %1511 = vmatprep.subr.mxu0 0.0
  %1512 = vmatpush1.msra.mxu0 0.0
  %1513 = vmatprep.subr.mxu0 0.0
  %1514 = vmatpush1.msra.mxu0 0.0
  %1515 = vmatprep.subr.mxu0 0.0
  %1516 = vmatpush1.msra.mxu0 0.0
  %1517 = vmatprep.subr.mxu0 0.0
  %1518 = vmatpush1.msra.mxu0 0.0
  %1519 = vmatprep.subr.mxu0 0.0
  %1520 = vmatpush1.msra.mxu0 0.0
  %1521 = vmatprep.subr.mxu0 0.0
  %1522 = vmatpush1.msra.mxu0 %v40
  %1523 = vmatprep.subr.mxu0 0.0
  %1524 = vmatpush2.msra.mxu0 0.0
  %1525 = vmatprep.subr.mxu0 0.0
  %1526 = vmatpush2.msra.mxu0 0.0
  %1527 = vmatprep.subr.mxu0 0.0
  %1528 = vmatpush2.msra.mxu0 0.0
  %1529 = vmatprep.subr.mxu0 0.0
  %1530 = vmatpush2.msra.mxu0 0.0
  %1531 = vmatprep.subr.mxu0 0.0
  %1532 = vmatpush2.msra.mxu0 0.0
  %1533 = vmatprep.subr.mxu0 0.0
  %1534 = vmatpush2.msra.mxu0 0.0
  %1535 = vmatprep.subr.mxu0 0.0
  %1536 = vmatpush2.msra.mxu0 0.0
  %1537 = vmatprep.subr.mxu0 0.0
  %1538 = vmatpush2.msra.mxu0 0.0
  %1539 = vmatprep.subr.mxu0 0.0
  %1540 = vmatpush2.msra.mxu0 0.0
  %1541 = vmatprep.subr.mxu0 0.0
  %1542 = vmatpush2.msra.mxu0 0.0
  %1543 = vmatprep.subr.mxu0 0.0
  %1544 = vmatpush2.msra.mxu0 0.0
  %1545 = vmatprep.subr.mxu0 0.0
  %1546 = vmatpush2.msra.mxu0 0.0
  %1547 = vmatprep.subr.mxu0 0.0
  %1548 = vmatpush2.msra.mxu0 0.0
  %1549 = vmatprep.subr.mxu0 0.0
  %1550 = vmatpush2.msra.mxu0 0.0
  %1551 = vmatprep.subr.mxu0 0.0
  %1552 = vmatpush2.msra.mxu0 0.0
  %1553 = vmatprep.subr.mxu0 0.0
  %1554 = vmatpush2.msra.mxu0 0.0
  %1555 = vmatprep.mubr.f32.mxu0 0.0
  %1556 = vmatmul.mubr.f32.gmra.mxu0 %v1486
  %v1557 = vpop.f32.mrf.mxu0
  %v1558 = vadd.f32 0.0, %v1557
  %v1559 = vpop.f32.mrf.mxu0
  %1560 = vmatprep.mubr.f32.mxu0 0.0
  %1561 = vmatmul.mubr.f32.gmra.mxu0 %v1489
  %v1562 = vpop.f32.mrf.mxu0
  %v1563 = vadd.f32 0.0, %v1562
  %v1564 = vpop.f32.mrf.mxu0
  %1565 = vdwg.mxu0
  %v1567 = vsel %vm359, %v1315, 0
  %v1570 = vsel %vm359, %v1320, 0
  %1572 = vmatprep.subr.mxu0 0.0
  %1573 = vmatpush1.msra.mxu0 0.0
  %1574 = vmatprep.subr.mxu0 0.0
  %1575 = vmatpush1.msra.mxu0 0.0
  %1576 = vmatprep.subr.mxu0 0.0
  %1577 = vmatpush1.msra.mxu0 0.0
  %1578 = vmatprep.subr.mxu0 0.0
  %1579 = vmatpush1.msra.mxu0 0.0
  %1580 = vmatprep.subr.mxu0 0.0
  %1581 = vmatpush1.msra.mxu0 0.0
  %1582 = vmatprep.subr.mxu0 0.0
  %1583 = vmatpush1.msra.mxu0 0.0
  %1584 = vmatprep.subr.mxu0 0.0
  %1585 = vmatpush1.msra.mxu0 0.0
  %1586 = vmatprep.subr.mxu0 0.0
  %1587 = vmatpush1.msra.mxu0 0.0
  %1588 = vmatprep.subr.mxu0 0.0
  %1589 = vmatpush1.msra.mxu0 0.0
  %1590 = vmatprep.subr.mxu0 0.0
  %1591 = vmatpush1.msra.mxu0 0.0
  %1592 = vmatprep.subr.mxu0 0.0
  %1593 = vmatpush1.msra.mxu0 0.0
  %1594 = vmatprep.subr.mxu0 0.0
  %1595 = vmatpush1.msra.mxu0 0.0
  %1596 = vmatprep.subr.mxu0 0.0
  %1597 = vmatpush1.msra.mxu0 0.0
  %1598 = vmatprep.subr.mxu0 0.0
  %1599 = vmatpush1.msra.mxu0 0.0
  %1600 = vmatprep.subr.mxu0 0.0
  %1601 = vmatpush1.msra.mxu0 0.0
  %1602 = vmatprep.subr.mxu0 0.0
  %1603 = vmatpush1.msra.mxu0 %v41
  %1604 = vmatprep.subr.mxu0 0.0
  %1605 = vmatpush2.msra.mxu0 0.0
  %1606 = vmatprep.subr.mxu0 0.0
  %1607 = vmatpush2.msra.mxu0 0.0
  %1608 = vmatprep.subr.mxu0 0.0
  %1609 = vmatpush2.msra.mxu0 0.0
  %1610 = vmatprep.subr.mxu0 0.0
  %1611 = vmatpush2.msra.mxu0 0.0
  %1612 = vmatprep.subr.mxu0 0.0
  %1613 = vmatpush2.msra.mxu0 0.0
  %1614 = vmatprep.subr.mxu0 0.0
  %1615 = vmatpush2.msra.mxu0 0.0
  %1616 = vmatprep.subr.mxu0 0.0
  %1617 = vmatpush2.msra.mxu0 0.0
  %1618 = vmatprep.subr.mxu0 0.0
  %1619 = vmatpush2.msra.mxu0 0.0
  %1620 = vmatprep.subr.mxu0 0.0
  %1621 = vmatpush2.msra.mxu0 0.0
  %1622 = vmatprep.subr.mxu0 0.0
  %1623 = vmatpush2.msra.mxu0 0.0
  %1624 = vmatprep.subr.mxu0 0.0
  %1625 = vmatpush2.msra.mxu0 0.0
  %1626 = vmatprep.subr.mxu0 0.0
  %1627 = vmatpush2.msra.mxu0 0.0
  %1628 = vmatprep.subr.mxu0 0.0
  %1629 = vmatpush2.msra.mxu0 0.0
  %1630 = vmatprep.subr.mxu0 0.0
  %1631 = vmatpush2.msra.mxu0 0.0
  %1632 = vmatprep.subr.mxu0 0.0
  %1633 = vmatpush2.msra.mxu0 0.0
  %1634 = vmatprep.subr.mxu0 0.0
  %1635 = vmatpush2.msra.mxu0 0.0
  %1636 = vmatprep.mubr.f32.mxu0 0.0
  %1637 = vmatmul.mubr.f32.gmra.mxu0 %v1567
  %v1638 = vpop.f32.mrf.mxu0
  %v1639 = vadd.f32 0.0, %v1638
  %v1640 = vpop.f32.mrf.mxu0
  %1641 = vmatprep.mubr.f32.mxu0 0.0
  %1642 = vmatmul.mubr.f32.gmra.mxu0 %v1570
  %v1643 = vpop.f32.mrf.mxu0
  %v1644 = vadd.f32 0.0, %v1643
  %v1645 = vpop.f32.mrf.mxu0
  %1646 = vdwg.mxu0
  %v1648 = vsel %vm359, %v1396, 0
  %v1651 = vsel %vm359, %v1401, 0
  %1653 = vmatprep.subr.mxu0 0.0
  %1654 = vmatpush1.msra.mxu0 0.0
  %1655 = vmatprep.subr.mxu0 0.0
  %1656 = vmatpush1.msra.mxu0 0.0
  %1657 = vmatprep.subr.mxu0 0.0
  %1658 = vmatpush1.msra.mxu0 0.0
  %1659 = vmatprep.subr.mxu0 0.0
  %1660 = vmatpush1.msra.mxu0 0.0
  %1661 = vmatprep.subr.mxu0 0.0
  %1662 = vmatpush1.msra.mxu0 0.0
  %1663 = vmatprep.subr.mxu0 0.0
  %1664 = vmatpush1.msra.mxu0 0.0
  %1665 = vmatprep.subr.mxu0 0.0
  %1666 = vmatpush1.msra.mxu0 0.0
  %1667 = vmatprep.subr.mxu0 0.0
  %1668 = vmatpush1.msra.mxu0 0.0
  %1669 = vmatprep.subr.mxu0 0.0
  %1670 = vmatpush1.msra.mxu0 0.0
  %1671 = vmatprep.subr.mxu0 0.0
  %1672 = vmatpush1.msra.mxu0 0.0
  %1673 = vmatprep.subr.mxu0 0.0
  %1674 = vmatpush1.msra.mxu0 0.0
  %1675 = vmatprep.subr.mxu0 0.0
  %1676 = vmatpush1.msra.mxu0 0.0
  %1677 = vmatprep.subr.mxu0 0.0
  %1678 = vmatpush1.msra.mxu0 0.0
  %1679 = vmatprep.subr.mxu0 0.0
  %1680 = vmatpush1.msra.mxu0 0.0
  %1681 = vmatprep.subr.mxu0 0.0
  %1682 = vmatpush1.msra.mxu0 0.0
  %1683 = vmatprep.subr.mxu0 0.0
  %1684 = vmatpush1.msra.mxu0 %v42
  %1685 = vmatprep.subr.mxu0 0.0
  %1686 = vmatpush2.msra.mxu0 0.0
  %1687 = vmatprep.subr.mxu0 0.0
  %1688 = vmatpush2.msra.mxu0 0.0
  %1689 = vmatprep.subr.mxu0 0.0
  %1690 = vmatpush2.msra.mxu0 0.0
  %1691 = vmatprep.subr.mxu0 0.0
  %1692 = vmatpush2.msra.mxu0 0.0
  %1693 = vmatprep.subr.mxu0 0.0
  %1694 = vmatpush2.msra.mxu0 0.0
  %1695 = vmatprep.subr.mxu0 0.0
  %1696 = vmatpush2.msra.mxu0 0.0
  %1697 = vmatprep.subr.mxu0 0.0
  %1698 = vmatpush2.msra.mxu0 0.0
  %1699 = vmatprep.subr.mxu0 0.0
  %1700 = vmatpush2.msra.mxu0 0.0
  %1701 = vmatprep.subr.mxu0 0.0
  %1702 = vmatpush2.msra.mxu0 0.0
  %1703 = vmatprep.subr.mxu0 0.0
  %1704 = vmatpush2.msra.mxu0 0.0
  %1705 = vmatprep.subr.mxu0 0.0
  %1706 = vmatpush2.msra.mxu0 0.0
  %1707 = vmatprep.subr.mxu0 0.0
  %1708 = vmatpush2.msra.mxu0 0.0
  %1709 = vmatprep.subr.mxu0 0.0
  %1710 = vmatpush2.msra.mxu0 0.0
  %1711 = vmatprep.subr.mxu0 0.0
  %1712 = vmatpush2.msra.mxu0 0.0
  %1713 = vmatprep.subr.mxu0 0.0
  %1714 = vmatpush2.msra.mxu0 0.0
  %1715 = vmatprep.subr.mxu0 0.0
  %1716 = vmatpush2.msra.mxu0 0.0
  %1717 = vmatprep.mubr.f32.mxu0 0.0
  %1718 = vmatmul.mubr.f32.gmra.mxu0 %v1648
  %v1719 = vpop.f32.mrf.mxu0
  %v1720 = vadd.f32 0.0, %v1719
  %v1721 = vpop.f32.mrf.mxu0
  %1722 = vmatprep.mubr.f32.mxu0 0.0
  %1723 = vmatmul.mubr.f32.gmra.mxu0 %v1651
  %v1724 = vpop.f32.mrf.mxu0
  %v1725 = vadd.f32 0.0, %v1724
  %v1726 = vpop.f32.mrf.mxu0
  %1727 = vdwg.mxu0
  %v1729 = vsel %vm359, %v1477, 0
  %v1732 = vsel %vm359, %v1482, 0
  %1734 = vmatprep.subr.mxu0 0.0
  %1735 = vmatpush1.msra.mxu0 0.0
  %1736 = vmatprep.subr.mxu0 0.0
  %1737 = vmatpush1.msra.mxu0 0.0
  %1738 = vmatprep.subr.mxu0 0.0
  %1739 = vmatpush1.msra.mxu0 0.0
  %1740 = vmatprep.subr.mxu0 0.0
  %1741 = vmatpush1.msra.mxu0 0.0
  %1742 = vmatprep.subr.mxu0 0.0
  %1743 = vmatpush1.msra.mxu0 0.0
  %1744 = vmatprep.subr.mxu0 0.0
  %1745 = vmatpush1.msra.mxu0 0.0
  %1746 = vmatprep.subr.mxu0 0.0
  %1747 = vmatpush1.msra.mxu0 0.0
  %1748 = vmatprep.subr.mxu0 0.0
  %1749 = vmatpush1.msra.mxu0 0.0
  %1750 = vmatprep.subr.mxu0 0.0
  %1751 = vmatpush1.msra.mxu0 0.0
  %1752 = vmatprep.subr.mxu0 0.0
  %1753 = vmatpush1.msra.mxu0 0.0
  %1754 = vmatprep.subr.mxu0 0.0
  %1755 = vmatpush1.msra.mxu0 0.0
  %1756 = vmatprep.subr.mxu0 0.0
  %1757 = vmatpush1.msra.mxu0 0.0
  %1758 = vmatprep.subr.mxu0 0.0
  %1759 = vmatpush1.msra.mxu0 0.0
  %1760 = vmatprep.subr.mxu0 0.0
  %1761 = vmatpush1.msra.mxu0 0.0
  %1762 = vmatprep.subr.mxu0 0.0
  %1763 = vmatpush1.msra.mxu0 0.0
  %1764 = vmatprep.subr.mxu0 0.0
  %1765 = vmatpush1.msra.mxu0 %v43
  %1766 = vmatprep.subr.mxu0 0.0
  %1767 = vmatpush2.msra.mxu0 0.0
  %1768 = vmatprep.subr.mxu0 0.0
  %1769 = vmatpush2.msra.mxu0 0.0
  %1770 = vmatprep.subr.mxu0 0.0
  %1771 = vmatpush2.msra.mxu0 0.0
  %1772 = vmatprep.subr.mxu0 0.0
  %1773 = vmatpush2.msra.mxu0 0.0
  %1774 = vmatprep.subr.mxu0 0.0
  %1775 = vmatpush2.msra.mxu0 0.0
  %1776 = vmatprep.subr.mxu0 0.0
  %1777 = vmatpush2.msra.mxu0 0.0
  %1778 = vmatprep.subr.mxu0 0.0
  %1779 = vmatpush2.msra.mxu0 0.0
  %1780 = vmatprep.subr.mxu0 0.0
  %1781 = vmatpush2.msra.mxu0 0.0
  %1782 = vmatprep.subr.mxu0 0.0
  %1783 = vmatpush2.msra.mxu0 0.0
  %1784 = vmatprep.subr.mxu0 0.0
  %1785 = vmatpush2.msra.mxu0 0.0
  %1786 = vmatprep.subr.mxu0 0.0
  %1787 = vmatpush2.msra.mxu0 0.0
  %1788 = vmatprep.subr.mxu0 0.0
  %1789 = vmatpush2.msra.mxu0 0.0
  %1790 = vmatprep.subr.mxu0 0.0
  %1791 = vmatpush2.msra.mxu0 0.0
  %1792 = vmatprep.subr.mxu0 0.0
  %1793 = vmatpush2.msra.mxu0 0.0
  %1794 = vmatprep.subr.mxu0 0.0
  %1795 = vmatpush2.msra.mxu0 0.0
  %1796 = vmatprep.subr.mxu0 0.0
  %1797 = vmatpush2.msra.mxu0 0.0
  %1798 = vmatprep.mubr.f32.mxu0 0.0
  %1799 = vmatmul.mubr.f32.gmra.mxu0 %v1729
  %v1800 = vpop.f32.mrf.mxu0
  %v1801 = vadd.f32 0.0, %v1800
  %v1802 = vpop.f32.mrf.mxu0
  %1803 = vmatprep.mubr.f32.mxu0 0.0
  %1804 = vmatmul.mubr.f32.gmra.mxu0 %v1732
  %v1805 = vpop.f32.mrf.mxu0
  %v1806 = vadd.f32 0.0, %v1805
  %v1807 = vpop.f32.mrf.mxu0
  %1808 = vdwg.mxu0
  %v1810 = vsel %vm359, %v1558, 0
  %v1813 = vsel %vm359, %v1563, 0
  %1815 = vmatprep.subr.mxu0 0.0
  %1816 = vmatpush1.msra.mxu0 0.0
  %1817 = vmatprep.subr.mxu0 0.0
  %1818 = vmatpush1.msra.mxu0 0.0
  %1819 = vmatprep.subr.mxu0 0.0
  %1820 = vmatpush1.msra.mxu0 0.0
  %1821 = vmatprep.subr.mxu0 0.0
  %1822 = vmatpush1.msra.mxu0 0.0
  %1823 = vmatprep.subr.mxu0 0.0
  %1824 = vmatpush1.msra.mxu0 0.0
  %1825 = vmatprep.subr.mxu0 0.0
  %1826 = vmatpush1.msra.mxu0 0.0
  %1827 = vmatprep.subr.mxu0 0.0
  %1828 = vmatpush1.msra.mxu0 0.0
  %1829 = vmatprep.subr.mxu0 0.0
  %1830 = vmatpush1.msra.mxu0 0.0
  %1831 = vmatprep.subr.mxu0 0.0
  %1832 = vmatpush1.msra.mxu0 0.0
  %1833 = vmatprep.subr.mxu0 0.0
  %1834 = vmatpush1.msra.mxu0 0.0
  %1835 = vmatprep.subr.mxu0 0.0
  %1836 = vmatpush1.msra.mxu0 0.0
  %1837 = vmatprep.subr.mxu0 0.0
  %1838 = vmatpush1.msra.mxu0 0.0
  %1839 = vmatprep.subr.mxu0 0.0
  %1840 = vmatpush1.msra.mxu0 0.0
  %1841 = vmatprep.subr.mxu0 0.0
  %1842 = vmatpush1.msra.mxu0 0.0
  %1843 = vmatprep.subr.mxu0 0.0
  %1844 = vmatpush1.msra.mxu0 0.0
  %1845 = vmatprep.subr.mxu0 0.0
  %1846 = vmatpush1.msra.mxu0 %v44
  %1847 = vmatprep.subr.mxu0 0.0
  %1848 = vmatpush2.msra.mxu0 0.0
  %1849 = vmatprep.subr.mxu0 0.0
  %1850 = vmatpush2.msra.mxu0 0.0
  %1851 = vmatprep.subr.mxu0 0.0
  %1852 = vmatpush2.msra.mxu0 0.0
  %1853 = vmatprep.subr.mxu0 0.0
  %1854 = vmatpush2.msra.mxu0 0.0
  %1855 = vmatprep.subr.mxu0 0.0
  %1856 = vmatpush2.msra.mxu0 0.0
  %1857 = vmatprep.subr.mxu0 0.0
  %1858 = vmatpush2.msra.mxu0 0.0
  %1859 = vmatprep.subr.mxu0 0.0
  %1860 = vmatpush2.msra.mxu0 0.0
  %1861 = vmatprep.subr.mxu0 0.0
  %1862 = vmatpush2.msra.mxu0 0.0
  %1863 = vmatprep.subr.mxu0 0.0
  %1864 = vmatpush2.msra.mxu0 0.0
  %1865 = vmatprep.subr.mxu0 0.0
  %1866 = vmatpush2.msra.mxu0 0.0
  %1867 = vmatprep.subr.mxu0 0.0
  %1868 = vmatpush2.msra.mxu0 0.0
  %1869 = vmatprep.subr.mxu0 0.0
  %1870 = vmatpush2.msra.mxu0 0.0
  %1871 = vmatprep.subr.mxu0 0.0
  %1872 = vmatpush2.msra.mxu0 0.0
  %1873 = vmatprep.subr.mxu0 0.0
  %1874 = vmatpush2.msra.mxu0 0.0
  %1875 = vmatprep.subr.mxu0 0.0
  %1876 = vmatpush2.msra.mxu0 0.0
  %1877 = vmatprep.subr.mxu0 0.0
  %1878 = vmatpush2.msra.mxu0 0.0
  %1879 = vmatprep.mubr.f32.mxu0 0.0
  %1880 = vmatmul.mubr.f32.gmra.mxu0 %v1810
  %v1881 = vpop.f32.mrf.mxu0
  %v1882 = vadd.f32 0.0, %v1881
  %v1883 = vpop.f32.mrf.mxu0
  %1884 = vmatprep.mubr.f32.mxu0 0.0
  %1885 = vmatmul.mubr.f32.gmra.mxu0 %v1813
  %v1886 = vpop.f32.mrf.mxu0
  %v1887 = vadd.f32 0.0, %v1886
  %v1888 = vpop.f32.mrf.mxu0
  %1889 = vdwg.mxu0
  %v1891 = vsel %vm359, %v1639, 0
  %v1894 = vsel %vm359, %v1644, 0
  %1896 = vmatprep.subr.mxu0 0.0
  %1897 = vmatpush1.msra.mxu0 0.0
  %1898 = vmatprep.subr.mxu0 0.0
  %1899 = vmatpush1.msra.mxu0 0.0
  %1900 = vmatprep.subr.mxu0 0.0
  %1901 = vmatpush1.msra.mxu0 0.0
  %1902 = vmatprep.subr.mxu0 0.0
  %1903 = vmatpush1.msra.mxu0 0.0
  %1904 = vmatprep.subr.mxu0 0.0
  %1905 = vmatpush1.msra.mxu0 0.0
  %1906 = vmatprep.subr.mxu0 0.0
  %1907 = vmatpush1.msra.mxu0 0.0
  %1908 = vmatprep.subr.mxu0 0.0
  %1909 = vmatpush1.msra.mxu0 0.0
  %1910 = vmatprep.subr.mxu0 0.0
  %1911 = vmatpush1.msra.mxu0 0.0
  %1912 = vmatprep.subr.mxu0 0.0
  %1913 = vmatpush1.msra.mxu0 0.0
  %1914 = vmatprep.subr.mxu0 0.0
  %1915 = vmatpush1.msra.mxu0 0.0
  %1916 = vmatprep.subr.mxu0 0.0
  %1917 = vmatpush1.msra.mxu0 0.0
  %1918 = vmatprep.subr.mxu0 0.0
  %1919 = vmatpush1.msra.mxu0 0.0
  %1920 = vmatprep.subr.mxu0 0.0
  %1921 = vmatpush1.msra.mxu0 0.0
  %1922 = vmatprep.subr.mxu0 0.0
  %1923 = vmatpush1.msra.mxu0 0.0
  %1924 = vmatprep.subr.mxu0 0.0
  %1925 = vmatpush1.msra.mxu0 0.0
  %1926 = vmatprep.subr.mxu0 0.0
  %1927 = vmatpush1.msra.mxu0 %v45
  %1928 = vmatprep.subr.mxu0 0.0
  %1929 = vmatpush2.msra.mxu0 0.0
  %1930 = vmatprep.subr.mxu0 0.0
  %1931 = vmatpush2.msra.mxu0 0.0
  %1932 = vmatprep.subr.mxu0 0.0
  %1933 = vmatpush2.msra.mxu0 0.0
  %1934 = vmatprep.subr.mxu0 0.0
  %1935 = vmatpush2.msra.mxu0 0.0
  %1936 = vmatprep.subr.mxu0 0.0
  %1937 = vmatpush2.msra.mxu0 0.0
  %1938 = vmatprep.subr.mxu0 0.0
  %1939 = vmatpush2.msra.mxu0 0.0
  %1940 = vmatprep.subr.mxu0 0.0
  %1941 = vmatpush2.msra.mxu0 0.0
  %1942 = vmatprep.subr.mxu0 0.0
  %1943 = vmatpush2.msra.mxu0 0.0
  %1944 = vmatprep.subr.mxu0 0.0
  %1945 = vmatpush2.msra.mxu0 0.0
  %1946 = vmatprep.subr.mxu0 0.0
  %1947 = vmatpush2.msra.mxu0 0.0
  %1948 = vmatprep.subr.mxu0 0.0
  %1949 = vmatpush2.msra.mxu0 0.0
  %1950 = vmatprep.subr.mxu0 0.0
  %1951 = vmatpush2.msra.mxu0 0.0
  %1952 = vmatprep.subr.mxu0 0.0
  %1953 = vmatpush2.msra.mxu0 0.0
  %1954 = vmatprep.subr.mxu0 0.0
  %1955 = vmatpush2.msra.mxu0 0.0
  %1956 = vmatprep.subr.mxu0 0.0
  %1957 = vmatpush2.msra.mxu0 0.0
  %1958 = vmatprep.subr.mxu0 0.0
  %1959 = vmatpush2.msra.mxu0 0.0
  %1960 = vmatprep.mubr.f32.mxu0 0.0
  %1961 = vmatmul.mubr.f32.gmra.mxu0 %v1891
  %v1962 = vpop.f32.mrf.mxu0
  %v1963 = vadd.f32 0.0, %v1962
  %v1964 = vpop.f32.mrf.mxu0
  %1965 = vmatprep.mubr.f32.mxu0 0.0
  %1966 = vmatmul.mubr.f32.gmra.mxu0 %v1894
  %v1967 = vpop.f32.mrf.mxu0
  %v1968 = vadd.f32 0.0, %v1967
  %v1969 = vpop.f32.mrf.mxu0
  %1970 = vdwg.mxu0
  %v1972 = vsel %vm359, %v1720, 0
  %v1975 = vsel %vm359, %v1725, 0
  %1977 = vmatprep.subr.mxu0 0.0
  %1978 = vmatpush1.msra.mxu0 0.0
  %1979 = vmatprep.subr.mxu0 0.0
  %1980 = vmatpush1.msra.mxu0 0.0
  %1981 = vmatprep.subr.mxu0 0.0
  %1982 = vmatpush1.msra.mxu0 0.0
  %1983 = vmatprep.subr.mxu0 0.0
  %1984 = vmatpush1.msra.mxu0 0.0
  %1985 = vmatprep.subr.mxu0 0.0
  %1986 = vmatpush1.msra.mxu0 0.0
  %1987 = vmatprep.subr.mxu0 0.0
  %1988 = vmatpush1.msra.mxu0 0.0
  %1989 = vmatprep.subr.mxu0 0.0
  %1990 = vmatpush1.msra.mxu0 0.0
  %1991 = vmatprep.subr.mxu0 0.0
  %1992 = vmatpush1.msra.mxu0 0.0
  %1993 = vmatprep.subr.mxu0 0.0
  %1994 = vmatpush1.msra.mxu0 0.0
  %1995 = vmatprep.subr.mxu0 0.0
  %1996 = vmatpush1.msra.mxu0 0.0
  %1997 = vmatprep.subr.mxu0 0.0
  %1998 = vmatpush1.msra.mxu0 0.0
  %1999 = vmatprep.subr.mxu0 0.0
  %2000 = vmatpush1.msra.mxu0 0.0
  %2001 = vmatprep.subr.mxu0 0.0
  %2002 = vmatpush1.msra.mxu0 0.0
  %2003 = vmatprep.subr.mxu0 0.0
  %2004 = vmatpush1.msra.mxu0 0.0
  %2005 = vmatprep.subr.mxu0 0.0
  %2006 = vmatpush1.msra.mxu0 0.0
  %2007 = vmatprep.subr.mxu0 0.0
  %2008 = vmatpush1.msra.mxu0 %v46
  %2009 = vmatprep.subr.mxu0 0.0
  %2010 = vmatpush2.msra.mxu0 0.0
  %2011 = vmatprep.subr.mxu0 0.0
  %2012 = vmatpush2.msra.mxu0 0.0
  %2013 = vmatprep.subr.mxu0 0.0
  %2014 = vmatpush2.msra.mxu0 0.0
  %2015 = vmatprep.subr.mxu0 0.0
  %2016 = vmatpush2.msra.mxu0 0.0
  %2017 = vmatprep.subr.mxu0 0.0
  %2018 = vmatpush2.msra.mxu0 0.0
  %2019 = vmatprep.subr.mxu0 0.0
  %2020 = vmatpush2.msra.mxu0 0.0
  %2021 = vmatprep.subr.mxu0 0.0
  %2022 = vmatpush2.msra.mxu0 0.0
  %2023 = vmatprep.subr.mxu0 0.0
  %2024 = vmatpush2.msra.mxu0 0.0
  %2025 = vmatprep.subr.mxu0 0.0
  %2026 = vmatpush2.msra.mxu0 0.0
  %2027 = vmatprep.subr.mxu0 0.0
  %2028 = vmatpush2.msra.mxu0 0.0
  %2029 = vmatprep.subr.mxu0 0.0
  %2030 = vmatpush2.msra.mxu0 0.0
  %2031 = vmatprep.subr.mxu0 0.0
  %2032 = vmatpush2.msra.mxu0 0.0
  %2033 = vmatprep.subr.mxu0 0.0
  %2034 = vmatpush2.msra.mxu0 0.0
  %2035 = vmatprep.subr.mxu0 0.0
  %2036 = vmatpush2.msra.mxu0 0.0
  %2037 = vmatprep.subr.mxu0 0.0
  %2038 = vmatpush2.msra.mxu0 0.0
  %2039 = vmatprep.subr.mxu0 0.0
  %2040 = vmatpush2.msra.mxu0 0.0
  %2041 = vmatprep.mubr.f32.mxu0 0.0
  %2042 = vmatmul.mubr.f32.gmra.mxu0 %v1972
  %v2043 = vpop.f32.mrf.mxu0
  %v2044 = vadd.f32 0.0, %v2043
  %v2045 = vpop.f32.mrf.mxu0
  %2046 = vmatprep.mubr.f32.mxu0 0.0
  %2047 = vmatmul.mubr.f32.gmra.mxu0 %v1975
  %v2048 = vpop.f32.mrf.mxu0
  %v2049 = vadd.f32 0.0, %v2048
  %v2050 = vpop.f32.mrf.mxu0
  %2051 = vdwg.mxu0
  %v2053 = vsel %vm359, %v1801, 0
  %v2056 = vsel %vm359, %v1806, 0
  %2058 = vmatprep.subr.mxu0 0.0
  %2059 = vmatpush1.msra.mxu0 0.0
  %2060 = vmatprep.subr.mxu0 0.0
  %2061 = vmatpush1.msra.mxu0 0.0
  %2062 = vmatprep.subr.mxu0 0.0
  %2063 = vmatpush1.msra.mxu0 0.0
  %2064 = vmatprep.subr.mxu0 0.0
  %2065 = vmatpush1.msra.mxu0 0.0
  %2066 = vmatprep.subr.mxu0 0.0
  %2067 = vmatpush1.msra.mxu0 0.0
  %2068 = vmatprep.subr.mxu0 0.0
  %2069 = vmatpush1.msra.mxu0 0.0
  %2070 = vmatprep.subr.mxu0 0.0
  %2071 = vmatpush1.msra.mxu0 0.0
  %2072 = vmatprep.subr.mxu0 0.0
  %2073 = vmatpush1.msra.mxu0 0.0
  %2074 = vmatprep.subr.mxu0 0.0
  %2075 = vmatpush1.msra.mxu0 0.0
  %2076 = vmatprep.subr.mxu0 0.0
  %2077 = vmatpush1.msra.mxu0 0.0
  %2078 = vmatprep.subr.mxu0 0.0
  %2079 = vmatpush1.msra.mxu0 0.0
  %2080 = vmatprep.subr.mxu0 0.0
  %2081 = vmatpush1.msra.mxu0 0.0
  %2082 = vmatprep.subr.mxu0 0.0
  %2083 = vmatpush1.msra.mxu0 0.0
  %2084 = vmatprep.subr.mxu0 0.0
  %2085 = vmatpush1.msra.mxu0 0.0
  %2086 = vmatprep.subr.mxu0 0.0
  %2087 = vmatpush1.msra.mxu0 0.0
  %2088 = vmatprep.subr.mxu0 0.0
  %2089 = vmatpush1.msra.mxu0 %v47
  %2090 = vmatprep.subr.mxu0 0.0
  %2091 = vmatpush2.msra.mxu0 0.0
  %2092 = vmatprep.subr.mxu0 0.0
  %2093 = vmatpush2.msra.mxu0 0.0
  %2094 = vmatprep.subr.mxu0 0.0
  %2095 = vmatpush2.msra.mxu0 0.0
  %2096 = vmatprep.subr.mxu0 0.0
  %2097 = vmatpush2.msra.mxu0 0.0
  %2098 = vmatprep.subr.mxu0 0.0
  %2099 = vmatpush2.msra.mxu0 0.0
  %2100 = vmatprep.subr.mxu0 0.0
  %2101 = vmatpush2.msra.mxu0 0.0
  %2102 = vmatprep.subr.mxu0 0.0
  %2103 = vmatpush2.msra.mxu0 0.0
  %2104 = vmatprep.subr.mxu0 0.0
  %2105 = vmatpush2.msra.mxu0 0.0
  %2106 = vmatprep.subr.mxu0 0.0
  %2107 = vmatpush2.msra.mxu0 0.0
  %2108 = vmatprep.subr.mxu0 0.0
  %2109 = vmatpush2.msra.mxu0 0.0
  %2110 = vmatprep.subr.mxu0 0.0
  %2111 = vmatpush2.msra.mxu0 0.0
  %2112 = vmatprep.subr.mxu0 0.0
  %2113 = vmatpush2.msra.mxu0 0.0
  %2114 = vmatprep.subr.mxu0 0.0
  %2115 = vmatpush2.msra.mxu0 0.0
  %2116 = vmatprep.subr.mxu0 0.0
  %2117 = vmatpush2.msra.mxu0 0.0
  %2118 = vmatprep.subr.mxu0 0.0
  %2119 = vmatpush2.msra.mxu0 0.0
  %2120 = vmatprep.subr.mxu0 0.0
  %2121 = vmatpush2.msra.mxu0 0.0
  %2122 = vmatprep.mubr.f32.mxu0 0.0
  %2123 = vmatmul.mubr.f32.gmra.mxu0 %v2053
  %v2124 = vpop.f32.mrf.mxu0
  %v2125 = vadd.f32 0.0, %v2124
  %v2126 = vpop.f32.mrf.mxu0
  %2127 = vmatprep.mubr.f32.mxu0 0.0
  %2128 = vmatmul.mubr.f32.gmra.mxu0 %v2056
  %v2129 = vpop.f32.mrf.mxu0
  %v2130 = vadd.f32 0.0, %v2129
  %v2131 = vpop.f32.mrf.mxu0
  %2132 = vdwg.mxu0
  %2133 = vmatprep.subr.mxu0 0.0
  %2134 = vmatpush1.xpose.msra.mxu0 0.0
  %2135 = vmatprep.subr.mxu0 0.0
  %2136 = vmatpush1.xpose.msra.mxu0 0.0
  %2137 = vmatprep.subr.mxu0 0.0
  %2138 = vmatpush1.xpose.msra.mxu0 0.0
  %2139 = vmatprep.subr.mxu0 0.0
  %2140 = vmatpush1.xpose.msra.mxu0 0.0
  %2141 = vmatprep.subr.mxu0 0.0
  %2142 = vmatpush1.xpose.msra.mxu0 0.0
  %2143 = vmatprep.subr.mxu0 0.0
  %2144 = vmatpush1.xpose.msra.mxu0 0.0
  %2145 = vmatprep.subr.mxu0 0.0
  %2146 = vmatpush1.xpose.msra.mxu0 0.0
  %2147 = vmatprep.subr.mxu0 0.0
  %2148 = vmatpush1.xpose.msra.mxu0 0.0
  %2149 = vmatprep.subr.mxu0 0.0
  %2150 = vmatpush1.xpose.msra.mxu0 0.0
  %2151 = vmatprep.subr.mxu0 0.0
  %2152 = vmatpush1.xpose.msra.mxu0 0.0
  %2153 = vmatprep.subr.mxu0 0.0
  %2154 = vmatpush1.xpose.msra.mxu0 0.0
  %2155 = vmatprep.subr.mxu0 0.0
  %2156 = vmatpush1.xpose.msra.mxu0 0.0
  %2157 = vmatprep.subr.mxu0 0.0
  %2158 = vmatpush1.xpose.msra.mxu0 0.0
  %2159 = vmatprep.subr.mxu0 0.0
  %2160 = vmatpush1.xpose.msra.mxu0 0.0
  %2161 = vmatprep.subr.mxu0 0.0
  %2162 = vmatpush1.xpose.msra.mxu0 %v1813
  %2163 = vmatprep.subr.mxu0 0.0
  %2164 = vmatpush1.xpose.msra.mxu0 %v1810
  %2165 = vmatprep.subr.mxu0 0.0
  %2166 = vmatpush2.xpose.msra.mxu0 0.0
  %2167 = vmatprep.subr.mxu0 0.0
  %2168 = vmatpush2.xpose.msra.mxu0 0.0
  %2169 = vmatprep.subr.mxu0 0.0
  %2170 = vmatpush2.xpose.msra.mxu0 0.0
  %2171 = vmatprep.subr.mxu0 0.0
  %2172 = vmatpush2.xpose.msra.mxu0 0.0
  %2173 = vmatprep.subr.mxu0 0.0
  %2174 = vmatpush2.xpose.msra.mxu0 0.0
  %2175 = vmatprep.subr.mxu0 0.0
  %2176 = vmatpush2.xpose.msra.mxu0 0.0
  %2177 = vmatprep.subr.mxu0 0.0
  %2178 = vmatpush2.xpose.msra.mxu0 0.0
  %2179 = vmatprep.subr.mxu0 0.0
  %2180 = vmatpush2.xpose.msra.mxu0 0.0
  %2181 = vmatprep.subr.mxu0 0.0
  %2182 = vmatpush2.xpose.msra.mxu0 0.0
  %2183 = vmatprep.subr.mxu0 0.0
  %2184 = vmatpush2.xpose.msra.mxu0 0.0
  %2185 = vmatprep.subr.mxu0 0.0
  %2186 = vmatpush2.xpose.msra.mxu0 0.0
  %2187 = vmatprep.subr.mxu0 0.0
  %2188 = vmatpush2.xpose.msra.mxu0 0.0
  %2189 = vmatprep.subr.mxu0 0.0
  %2190 = vmatpush2.xpose.msra.mxu0 0.0
  %2191 = vmatprep.subr.mxu0 0.0
  %2192 = vmatpush2.xpose.msra.mxu0 0.0
  %2193 = vmatprep.subr.mxu0 0.0
  %2194 = vmatpush2.xpose.msra.mxu0 0.0
  %2195 = vmatprep.subr.mxu0 0.0
  %2196 = vmatpush2.xpose.msra.mxu0 0.0
  %2197 = vmatprep.mubr.f32.mxu0 0.0
  %2198 = vmatmul.mubr.f32.gmra.mxu0 %v685
  %v2199 = vpop.f32.mrf.mxu0
  %v2200 = vadd.f32 0.0, %v2199
  %v2201 = vpop.f32.mrf.mxu0
  %2202 = vdwg.mxu0
  %2203 = vmatprep.subr.mxu0 0.0
  %2204 = vmatpush1.xpose.msra.mxu0 0.0
  %2205 = vmatprep.subr.mxu0 0.0
  %2206 = vmatpush1.xpose.msra.mxu0 0.0
  %2207 = vmatprep.subr.mxu0 0.0
  %2208 = vmatpush1.xpose.msra.mxu0 0.0
  %2209 = vmatprep.subr.mxu0 0.0
  %2210 = vmatpush1.xpose.msra.mxu0 0.0
  %2211 = vmatprep.subr.mxu0 0.0
  %2212 = vmatpush1.xpose.msra.mxu0 0.0
  %2213 = vmatprep.subr.mxu0 0.0
  %2214 = vmatpush1.xpose.msra.mxu0 0.0
  %2215 = vmatprep.subr.mxu0 0.0
  %2216 = vmatpush1.xpose.msra.mxu0 0.0
  %2217 = vmatprep.subr.mxu0 0.0
  %2218 = vmatpush1.xpose.msra.mxu0 0.0
  %2219 = vmatprep.subr.mxu0 0.0
  %2220 = vmatpush1.xpose.msra.mxu0 0.0
  %2221 = vmatprep.subr.mxu0 0.0
  %2222 = vmatpush1.xpose.msra.mxu0 0.0
  %2223 = vmatprep.subr.mxu0 0.0
  %2224 = vmatpush1.xpose.msra.mxu0 0.0
  %2225 = vmatprep.subr.mxu0 0.0
  %2226 = vmatpush1.xpose.msra.mxu0 0.0
  %2227 = vmatprep.subr.mxu0 0.0
  %2228 = vmatpush1.xpose.msra.mxu0 0.0
  %2229 = vmatprep.subr.mxu0 0.0
  %2230 = vmatpush1.xpose.msra.mxu0 0.0
  %2231 = vmatprep.subr.mxu0 0.0
  %2232 = vmatpush1.xpose.msra.mxu0 %v1894
  %2233 = vmatprep.subr.mxu0 0.0
  %2234 = vmatpush1.xpose.msra.mxu0 %v1891
  %2235 = vmatprep.subr.mxu0 0.0
  %2236 = vmatpush2.xpose.msra.mxu0 0.0
  %2237 = vmatprep.subr.mxu0 0.0
  %2238 = vmatpush2.xpose.msra.mxu0 0.0
  %2239 = vmatprep.subr.mxu0 0.0
  %2240 = vmatpush2.xpose.msra.mxu0 0.0
  %2241 = vmatprep.subr.mxu0 0.0
  %2242 = vmatpush2.xpose.msra.mxu0 0.0
  %2243 = vmatprep.subr.mxu0 0.0
  %2244 = vmatpush2.xpose.msra.mxu0 0.0
  %2245 = vmatprep.subr.mxu0 0.0
  %2246 = vmatpush2.xpose.msra.mxu0 0.0
  %2247 = vmatprep.subr.mxu0 0.0
  %2248 = vmatpush2.xpose.msra.mxu0 0.0
  %2249 = vmatprep.subr.mxu0 0.0
  %2250 = vmatpush2.xpose.msra.mxu0 0.0
  %2251 = vmatprep.subr.mxu0 0.0
  %2252 = vmatpush2.xpose.msra.mxu0 0.0
  %2253 = vmatprep.subr.mxu0 0.0
  %2254 = vmatpush2.xpose.msra.mxu0 0.0
  %2255 = vmatprep.subr.mxu0 0.0
  %2256 = vmatpush2.xpose.msra.mxu0 0.0
  %2257 = vmatprep.subr.mxu0 0.0
  %2258 = vmatpush2.xpose.msra.mxu0 0.0
  %2259 = vmatprep.subr.mxu0 0.0
  %2260 = vmatpush2.xpose.msra.mxu0 0.0
  %2261 = vmatprep.subr.mxu0 0.0
  %2262 = vmatpush2.xpose.msra.mxu0 0.0
  %2263 = vmatprep.subr.mxu0 0.0
  %2264 = vmatpush2.xpose.msra.mxu0 0.0
  %2265 = vmatprep.subr.mxu0 0.0
  %2266 = vmatpush2.xpose.msra.mxu0 0.0
  %2267 = vmatprep.mubr.f32.mxu0 0.0
  %2268 = vmatmul.mubr.f32.gmra.mxu0 %v758
  %v2269 = vpop.f32.mrf.mxu0
  %v2270 = vadd.f32 0.0, %v2269
  %v2271 = vpop.f32.mrf.mxu0
  %2272 = vdwg.mxu0
  %2273 = vmatprep.subr.mxu0 0.0
  %2274 = vmatpush1.xpose.msra.mxu0 0.0
  %2275 = vmatprep.subr.mxu0 0.0
  %2276 = vmatpush1.xpose.msra.mxu0 0.0
  %2277 = vmatprep.subr.mxu0 0.0
  %2278 = vmatpush1.xpose.msra.mxu0 0.0
  %2279 = vmatprep.subr.mxu0 0.0
  %2280 = vmatpush1.xpose.msra.mxu0 0.0
  %2281 = vmatprep.subr.mxu0 0.0
  %2282 = vmatpush1.xpose.msra.mxu0 0.0
  %2283 = vmatprep.subr.mxu0 0.0
  %2284 = vmatpush1.xpose.msra.mxu0 0.0
  %2285 = vmatprep.subr.mxu0 0.0
  %2286 = vmatpush1.xpose.msra.mxu0 0.0
  %2287 = vmatprep.subr.mxu0 0.0
  %2288 = vmatpush1.xpose.msra.mxu0 0.0
  %2289 = vmatprep.subr.mxu0 0.0
  %2290 = vmatpush1.xpose.msra.mxu0 0.0
  %2291 = vmatprep.subr.mxu0 0.0
  %2292 = vmatpush1.xpose.msra.mxu0 0.0
  %2293 = vmatprep.subr.mxu0 0.0
  %2294 = vmatpush1.xpose.msra.mxu0 0.0
  %2295 = vmatprep.subr.mxu0 0.0
  %2296 = vmatpush1.xpose.msra.mxu0 0.0
  %2297 = vmatprep.subr.mxu0 0.0
  %2298 = vmatpush1.xpose.msra.mxu0 0.0
  %2299 = vmatprep.subr.mxu0 0.0
  %2300 = vmatpush1.xpose.msra.mxu0 0.0
  %2301 = vmatprep.subr.mxu0 0.0
  %2302 = vmatpush1.xpose.msra.mxu0 %v1975
  %2303 = vmatprep.subr.mxu0 0.0
  %2304 = vmatpush1.xpose.msra.mxu0 %v1972
  %2305 = vmatprep.subr.mxu0 0.0
  %2306 = vmatpush2.xpose.msra.mxu0 0.0
  %2307 = vmatprep.subr.mxu0 0.0
  %2308 = vmatpush2.xpose.msra.mxu0 0.0
  %2309 = vmatprep.subr.mxu0 0.0
  %2310 = vmatpush2.xpose.msra.mxu0 0.0
  %2311 = vmatprep.subr.mxu0 0.0
  %2312 = vmatpush2.xpose.msra.mxu0 0.0
  %2313 = vmatprep.subr.mxu0 0.0
  %2314 = vmatpush2.xpose.msra.mxu0 0.0
  %2315 = vmatprep.subr.mxu0 0.0
  %2316 = vmatpush2.xpose.msra.mxu0 0.0
  %2317 = vmatprep.subr.mxu0 0.0
  %2318 = vmatpush2.xpose.msra.mxu0 0.0
  %2319 = vmatprep.subr.mxu0 0.0
  %2320 = vmatpush2.xpose.msra.mxu0 0.0
  %2321 = vmatprep.subr.mxu0 0.0
  %2322 = vmatpush2.xpose.msra.mxu0 0.0
  %2323 = vmatprep.subr.mxu0 0.0
  %2324 = vmatpush2.xpose.msra.mxu0 0.0
  %2325 = vmatprep.subr.mxu0 0.0
  %2326 = vmatpush2.xpose.msra.mxu0 0.0
  %2327 = vmatprep.subr.mxu0 0.0
  %2328 = vmatpush2.xpose.msra.mxu0 0.0
  %2329 = vmatprep.subr.mxu0 0.0
  %2330 = vmatpush2.xpose.msra.mxu0 0.0
  %2331 = vmatprep.subr.mxu0 0.0
  %2332 = vmatpush2.xpose.msra.mxu0 0.0
  %2333 = vmatprep.subr.mxu0 0.0
  %2334 = vmatpush2.xpose.msra.mxu0 0.0
  %2335 = vmatprep.subr.mxu0 0.0
  %2336 = vmatpush2.xpose.msra.mxu0 0.0
  %2337 = vmatprep.mubr.f32.mxu0 0.0
  %2338 = vmatmul.mubr.f32.gmra.mxu0 %v831
  %v2339 = vpop.f32.mrf.mxu0
  %v2340 = vadd.f32 0.0, %v2339
  %v2341 = vpop.f32.mrf.mxu0
  %2342 = vdwg.mxu0
  %2343 = vmatprep.subr.mxu0 0.0
  %2344 = vmatpush1.xpose.msra.mxu0 0.0
  %2345 = vmatprep.subr.mxu0 0.0
  %2346 = vmatpush1.xpose.msra.mxu0 0.0
  %2347 = vmatprep.subr.mxu0 0.0
  %2348 = vmatpush1.xpose.msra.mxu0 0.0
  %2349 = vmatprep.subr.mxu0 0.0
  %2350 = vmatpush1.xpose.msra.mxu0 0.0
  %2351 = vmatprep.subr.mxu0 0.0
  %2352 = vmatpush1.xpose.msra.mxu0 0.0
  %2353 = vmatprep.subr.mxu0 0.0
  %2354 = vmatpush1.xpose.msra.mxu0 0.0
  %2355 = vmatprep.subr.mxu0 0.0
  %2356 = vmatpush1.xpose.msra.mxu0 0.0
  %2357 = vmatprep.subr.mxu0 0.0
  %2358 = vmatpush1.xpose.msra.mxu0 0.0
  %2359 = vmatprep.subr.mxu0 0.0
  %2360 = vmatpush1.xpose.msra.mxu0 0.0
  %2361 = vmatprep.subr.mxu0 0.0
  %2362 = vmatpush1.xpose.msra.mxu0 0.0
  %2363 = vmatprep.subr.mxu0 0.0
  %2364 = vmatpush1.xpose.msra.mxu0 0.0
  %2365 = vmatprep.subr.mxu0 0.0
  %2366 = vmatpush1.xpose.msra.mxu0 0.0
  %2367 = vmatprep.subr.mxu0 0.0
  %2368 = vmatpush1.xpose.msra.mxu0 0.0
  %2369 = vmatprep.subr.mxu0 0.0
  %2370 = vmatpush1.xpose.msra.mxu0 0.0
  %2371 = vmatprep.subr.mxu0 0.0
  %2372 = vmatpush1.xpose.msra.mxu0 %v2056
  %2373 = vmatprep.subr.mxu0 0.0
  %2374 = vmatpush1.xpose.msra.mxu0 %v2053
  %2375 = vmatprep.subr.mxu0 0.0
  %2376 = vmatpush2.xpose.msra.mxu0 0.0
  %2377 = vmatprep.subr.mxu0 0.0
  %2378 = vmatpush2.xpose.msra.mxu0 0.0
  %2379 = vmatprep.subr.mxu0 0.0
  %2380 = vmatpush2.xpose.msra.mxu0 0.0
  %2381 = vmatprep.subr.mxu0 0.0
  %2382 = vmatpush2.xpose.msra.mxu0 0.0
  %2383 = vmatprep.subr.mxu0 0.0
  %2384 = vmatpush2.xpose.msra.mxu0 0.0
  %2385 = vmatprep.subr.mxu0 0.0
  %2386 = vmatpush2.xpose.msra.mxu0 0.0
  %2387 = vmatprep.subr.mxu0 0.0
  %2388 = vmatpush2.xpose.msra.mxu0 0.0
  %2389 = vmatprep.subr.mxu0 0.0
  %2390 = vmatpush2.xpose.msra.mxu0 0.0
  %2391 = vmatprep.subr.mxu0 0.0
  %2392 = vmatpush2.xpose.msra.mxu0 0.0
  %2393 = vmatprep.subr.mxu0 0.0
  %2394 = vmatpush2.xpose.msra.mxu0 0.0
  %2395 = vmatprep.subr.mxu0 0.0
  %2396 = vmatpush2.xpose.msra.mxu0 0.0
  %2397 = vmatprep.subr.mxu0 0.0
  %2398 = vmatpush2.xpose.msra.mxu0 0.0
  %2399 = vmatprep.subr.mxu0 0.0
  %2400 = vmatpush2.xpose.msra.mxu0 0.0
  %2401 = vmatprep.subr.mxu0 0.0
  %2402 = vmatpush2.xpose.msra.mxu0 0.0
  %2403 = vmatprep.subr.mxu0 0.0
  %2404 = vmatpush2.xpose.msra.mxu0 0.0
  %2405 = vmatprep.subr.mxu0 0.0
  %2406 = vmatpush2.xpose.msra.mxu0 0.0
  %2407 = vmatprep.mubr.f32.mxu0 0.0
  %2408 = vmatmul.mubr.f32.gmra.mxu0 %v904
  %v2409 = vpop.f32.mrf.mxu0
  %v2410 = vadd.f32 0.0, %v2409
  %v2411 = vpop.f32.mrf.mxu0
  %2412 = vdwg.mxu0
  %2414 = vset.pattern.permute.xlu0 0
  %2415 = vperm.xlu0 %2414, %v1882
  %v2416 = vpop.permute.xlu0 %2415
  %2419 = vset.pattern.permute.xlu0 0
  %2420 = vperm.xlu0 %2419, %v1887
  %v2421 = vpop.permute.xlu0 %2420
  %2424 = vset.pattern.permute.xlu0 0
  %2425 = vperm.xlu0 %2424, %v1963
  %v2426 = vpop.permute.xlu0 %2425
  %2429 = vset.pattern.permute.xlu0 0
  %2430 = vperm.xlu0 %2429, %v1968
  %v2431 = vpop.permute.xlu0 %2430
  %2434 = vset.pattern.permute.xlu0 0
  %2435 = vperm.xlu0 %2434, %v2044
  %v2436 = vpop.permute.xlu0 %2435
  %2439 = vset.pattern.permute.xlu0 0
  %2440 = vperm.xlu0 %2439, %v2049
  %v2441 = vpop.permute.xlu0 %2440
  %2444 = vset.pattern.permute.xlu0 0
  %2445 = vperm.xlu0 %2444, %v2125
  %v2446 = vpop.permute.xlu0 %2445
  %2449 = vset.pattern.permute.xlu0 0
  %2450 = vperm.xlu0 %2449, %v2130
  %v2451 = vpop.permute.xlu0 %2450
  %v2453 = vlaneseq
  %v2454 = vshrl.u32 %v2453, 7
  %v2455 = vsub.s32 0, %v2454
  %v2456 = vrot.slane %v2200, %v2455
  %v2457 = vlaneseq
  %v2458 = vshrl.u32 %v2457, 7
  %v2459 = vsub.s32 0, %v2458
  %v2460 = vrot.slane %v2270, %v2459
  %v2461 = vlaneseq
  %v2462 = vshrl.u32 %v2461, 7
  %v2463 = vsub.s32 0, %v2462
  %v2464 = vrot.slane %v2340, %v2463
  %v2465 = vlaneseq
  %v2466 = vshrl.u32 %v2465, 7
  %v2467 = vsub.s32 0, %v2466
  %v2468 = vrot.slane %v2410, %v2467
  %v2469 = vadd.f32 %v2416, %v2456
  %v2470 = vadd.f32 %v2421, %v2456
  %v2471 = vadd.f32 %v2426, %v2460
  %v2472 = vadd.f32 %v2431, %v2460
  %v2473 = vadd.f32 %v2436, %v2464
  %v2474 = vadd.f32 %v2441, %v2464
  %v2475 = vadd.f32 %v2446, %v2468
  %v2476 = vadd.f32 %v2451, %v2468
  %v2477 = vmul.f32 %v2469, 0.2
  %v2478 = vmul.f32 %v2470, 0.2
  %v2479 = vmul.f32 %v2471, 0.2
  %v2480 = vmul.f32 %v2472, 0.2
  %v2481 = vmul.f32 %v2473, 0.2
  %v2482 = vmul.f32 %v2474, 0.2
  %v2483 = vmul.f32 %v2475, 0.2
  %v2484 = vmul.f32 %v2476, 0.2
  %v2485 = vmax.f32 %v2469, %v2477
  %v2486 = vmax.f32 %v2470, %v2478
  %v2487 = vmax.f32 %v2471, %v2479
  %v2488 = vmax.f32 %v2472, %v2480
  %v2489 = vmax.f32 %v2473, %v2481
  %v2490 = vmax.f32 %v2474, %v2482
  %v2491 = vmax.f32 %v2475, %v2483
  %v2492 = vmax.f32 %v2476, %v2484
  %v2493 = vadd.f32 %v2485, %v16
  %v2494 = vadd.f32 %v2486, %v17
  %v2495 = vadd.f32 %v2487, %v18
  %v2496 = vadd.f32 %v2488, %v19
  %v2497 = vadd.f32 %v2489, %v20
  %v2498 = vadd.f32 %v2490, %v21
  %v2499 = vadd.f32 %v2491, %v22
  %v2500 = vadd.f32 %v2492, %v23
  %v2501 = vsel %vm1064, %v2493, -inf
  %2502 = vmax.xlane.f32.xlu0 %v2501
  %v2503 = vpop.xlane.xlu0 %2502
  %v2504 = vsel %vm1064, %v2494, -inf
  %2505 = vmax.xlane.f32.xlu0 %v2504
  %v2506 = vpop.xlane.xlu0 %2505
  %v2507 = vsel %vm1064, %v2495, -inf
  %2508 = vmax.xlane.f32.xlu0 %v2507
  %v2509 = vpop.xlane.xlu0 %2508
  %v2510 = vsel %vm1064, %v2496, -inf
  %2511 = vmax.xlane.f32.xlu0 %v2510
  %v2512 = vpop.xlane.xlu0 %2511
  %v2513 = vsel %vm1064, %v2497, -inf
  %2514 = vmax.xlane.f32.xlu0 %v2513
  %v2515 = vpop.xlane.xlu0 %2514
  %v2516 = vsel %vm1064, %v2498, -inf
  %2517 = vmax.xlane.f32.xlu0 %v2516
  %v2518 = vpop.xlane.xlu0 %2517
  %v2519 = vsel %vm1064, %v2499, -inf
  %2520 = vmax.xlane.f32.xlu0 %v2519
  %v2521 = vpop.xlane.xlu0 %2520
  %v2522 = vsel %vm1064, %v2500, -inf
  %2523 = vmax.xlane.f32.xlu0 %v2522
  %v2524 = vpop.xlane.xlu0 %2523
  %v2525 = vsub.f32 %v2493, %v2503
  %v2526 = vsub.f32 %v2494, %v2506
  %v2527 = vsub.f32 %v2495, %v2509
  %v2528 = vsub.f32 %v2496, %v2512
  %v2529 = vsub.f32 %v2497, %v2515
  %v2530 = vsub.f32 %v2498, %v2518
  %v2531 = vsub.f32 %v2499, %v2521
  %v2532 = vsub.f32 %v2500, %v2524
  %v2533 = vmul.f32 %v2525, 1.442695
  %v2534 = vpow.pop %v2533
  %v2535 = vmul.f32 %v2526, 1.442695
  %v2536 = vpow.pop %v2535
  %v2537 = vmul.f32 %v2527, 1.442695
  %v2538 = vpow.pop %v2537
  %v2539 = vmul.f32 %v2528, 1.442695
  %v2540 = vpow.pop %v2539
  %v2541 = vmul.f32 %v2529, 1.442695
  %v2542 = vpow.pop %v2541
  %v2543 = vmul.f32 %v2530, 1.442695
  %v2544 = vpow.pop %v2543
  %v2545 = vmul.f32 %v2531, 1.442695
  %v2546 = vpow.pop %v2545
  %v2547 = vmul.f32 %v2532, 1.442695
  %v2548 = vpow.pop %v2547
  %v2549 = vsel %vm1064, %v2534, 0.0
  %2550 = vadd.xlane.f32.xlu0 %v2549
  %v2551 = vpop.xlane.xlu0 %2550
  %v2552 = vsel %vm1064, %v2536, 0.0
  %2553 = vadd.xlane.f32.xlu0 %v2552
  %v2554 = vpop.xlane.xlu0 %2553
  %v2555 = vsel %vm1064, %v2538, 0.0
  %2556 = vadd.xlane.f32.xlu0 %v2555
  %v2557 = vpop.xlane.xlu0 %2556
  %v2558 = vsel %vm1064, %v2540, 0.0
  %2559 = vadd.xlane.f32.xlu0 %v2558
  %v2560 = vpop.xlane.xlu0 %2559
  %v2561 = vsel %vm1064, %v2542, 0.0
  %2562 = vadd.xlane.f32.xlu0 %v2561
  %v2563 = vpop.xlane.xlu0 %2562
  %v2564 = vsel %vm1064, %v2544, 0.0
  %2565 = vadd.xlane.f32.xlu0 %v2564
  %v2566 = vpop.xlane.xlu0 %2565
  %v2567 = vsel %vm1064, %v2546, 0.0
  %2568 = vadd.xlane.f32.xlu0 %v2567
  %v2569 = vpop.xlane.xlu0 %2568
  %v2570 = vsel %vm1064, %v2548, 0.0
  %2571 = vadd.xlane.f32.xlu0 %v2570
  %v2572 = vpop.xlane.xlu0 %2571
  %v2573 = vrcp.pop %v2551
  %v2574 = vmul.f32 1.0, %v2573
  %v2575 = vrcp.pop %v2554
  %v2576 = vmul.f32 1.0, %v2575
  %v2577 = vrcp.pop %v2557
  %v2578 = vmul.f32 1.0, %v2577
  %v2579 = vrcp.pop %v2560
  %v2580 = vmul.f32 1.0, %v2579
  %v2581 = vrcp.pop %v2563
  %v2582 = vmul.f32 1.0, %v2581
  %v2583 = vrcp.pop %v2566
  %v2584 = vmul.f32 1.0, %v2583
  %v2585 = vrcp.pop %v2569
  %v2586 = vmul.f32 1.0, %v2585
  %v2587 = vrcp.pop %v2572
  %v2588 = vmul.f32 1.0, %v2587
  %v2589 = vmul.f32 %v2534, %v2574
  %v2590 = vmul.f32 %v2536, %v2576
  %v2591 = vmul.f32 %v2538, %v2578
  %v2592 = vmul.f32 %v2540, %v2580
  %v2593 = vmul.f32 %v2542, %v2582
  %v2594 = vmul.f32 %v2544, %v2584
  %v2595 = vmul.f32 %v2546, %v2586
  %v2596 = vmul.f32 %v2548, %v2588
  %v2598 = vsel %vm1064, %v2589, 0
  %v2601 = vsel %vm1064, %v2590, 0
  %2603 = vmatprep.subr.mxu0 0.0
  %2604 = vmatpush1.msra.mxu0 0.0
  %2605 = vmatprep.subr.mxu0 0.0
  %2606 = vmatpush1.msra.mxu0 0.0
  %2607 = vmatprep.subr.mxu0 0.0
  %2608 = vmatpush1.msra.mxu0 0.0
  %2609 = vmatprep.subr.mxu0 0.0
  %2610 = vmatpush1.msra.mxu0 0.0
  %2611 = vmatprep.subr.mxu0 0.0
  %2612 = vmatpush1.msra.mxu0 0.0
  %2613 = vmatprep.subr.mxu0 0.0
  %2614 = vmatpush1.msra.mxu0 0.0
  %2615 = vmatprep.subr.mxu0 0.0
  %2616 = vmatpush1.msra.mxu0 0.0
  %2617 = vmatprep.subr.mxu0 0.0
  %2618 = vmatpush1.msra.mxu0 0.0
  %2619 = vmatprep.subr.mxu0 0.0
  %2620 = vmatpush1.msra.mxu0 0.0
  %2621 = vmatprep.subr.mxu0 0.0
  %2622 = vmatpush1.msra.mxu0 0.0
  %2623 = vmatprep.subr.mxu0 0.0
  %2624 = vmatpush1.msra.mxu0 0.0
  %2625 = vmatprep.subr.mxu0 0.0
  %2626 = vmatpush1.msra.mxu0 0.0
  %2627 = vmatprep.subr.mxu0 0.0
  %2628 = vmatpush1.msra.mxu0 0.0
  %2629 = vmatprep.subr.mxu0 0.0
  %2630 = vmatpush1.msra.mxu0 0.0
  %2631 = vmatprep.subr.mxu0 0.0
  %2632 = vmatpush1.msra.mxu0 %v1563
  %2633 = vmatprep.subr.mxu0 0.0
  %2634 = vmatpush1.msra.mxu0 %v1558
  %2635 = vmatprep.subr.mxu0 0.0
  %2636 = vmatpush2.msra.mxu0 0.0
  %2637 = vmatprep.subr.mxu0 0.0
  %2638 = vmatpush2.msra.mxu0 0.0
  %2639 = vmatprep.subr.mxu0 0.0
  %2640 = vmatpush2.msra.mxu0 0.0
  %2641 = vmatprep.subr.mxu0 0.0
  %2642 = vmatpush2.msra.mxu0 0.0
  %2643 = vmatprep.subr.mxu0 0.0
  %2644 = vmatpush2.msra.mxu0 0.0
  %2645 = vmatprep.subr.mxu0 0.0
  %2646 = vmatpush2.msra.mxu0 0.0
  %2647 = vmatprep.subr.mxu0 0.0
  %2648 = vmatpush2.msra.mxu0 0.0
  %2649 = vmatprep.subr.mxu0 0.0
  %2650 = vmatpush2.msra.mxu0 0.0
  %2651 = vmatprep.subr.mxu0 0.0
  %2652 = vmatpush2.msra.mxu0 0.0
  %2653 = vmatprep.subr.mxu0 0.0
  %2654 = vmatpush2.msra.mxu0 0.0
  %2655 = vmatprep.subr.mxu0 0.0
  %2656 = vmatpush2.msra.mxu0 0.0
  %2657 = vmatprep.subr.mxu0 0.0
  %2658 = vmatpush2.msra.mxu0 0.0
  %2659 = vmatprep.subr.mxu0 0.0
  %2660 = vmatpush2.msra.mxu0 0.0
  %2661 = vmatprep.subr.mxu0 0.0
  %2662 = vmatpush2.msra.mxu0 0.0
  %2663 = vmatprep.subr.mxu0 0.0
  %2664 = vmatpush2.msra.mxu0 0.0
  %2665 = vmatprep.subr.mxu0 0.0
  %2666 = vmatpush2.msra.mxu0 0.0
  %2667 = vmatprep.mubr.f32.mxu0 0.0
  %2668 = vmatmul.mubr.f32.gmra.mxu0 %v2598
  %v2669 = vpop.f32.mrf.mxu0
  %v2670 = vadd.f32 0.0, %v2669
  %v2671 = vpop.f32.mrf.mxu0
  %2672 = vmatprep.mubr.f32.mxu0 0.0
  %2673 = vmatmul.mubr.f32.gmra.mxu0 %v2601
  %v2674 = vpop.f32.mrf.mxu0
  %v2675 = vadd.f32 0.0, %v2674
  %v2676 = vpop.f32.mrf.mxu0
  %2677 = vdwg.mxu0
  %v2679 = vsel %vm1064, %v2591, 0
  %v2682 = vsel %vm1064, %v2592, 0
  %2684 = vmatprep.subr.mxu0 0.0
  %2685 = vmatpush1.msra.mxu0 0.0
  %2686 = vmatprep.subr.mxu0 0.0
  %2687 = vmatpush1.msra.mxu0 0.0
  %2688 = vmatprep.subr.mxu0 0.0
  %2689 = vmatpush1.msra.mxu0 0.0
  %2690 = vmatprep.subr.mxu0 0.0
  %2691 = vmatpush1.msra.mxu0 0.0
  %2692 = vmatprep.subr.mxu0 0.0
  %2693 = vmatpush1.msra.mxu0 0.0
  %2694 = vmatprep.subr.mxu0 0.0
  %2695 = vmatpush1.msra.mxu0 0.0
  %2696 = vmatprep.subr.mxu0 0.0
  %2697 = vmatpush1.msra.mxu0 0.0
  %2698 = vmatprep.subr.mxu0 0.0
  %2699 = vmatpush1.msra.mxu0 0.0
  %2700 = vmatprep.subr.mxu0 0.0
  %2701 = vmatpush1.msra.mxu0 0.0
  %2702 = vmatprep.subr.mxu0 0.0
  %2703 = vmatpush1.msra.mxu0 0.0
  %2704 = vmatprep.subr.mxu0 0.0
  %2705 = vmatpush1.msra.mxu0 0.0
  %2706 = vmatprep.subr.mxu0 0.0
  %2707 = vmatpush1.msra.mxu0 0.0
  %2708 = vmatprep.subr.mxu0 0.0
  %2709 = vmatpush1.msra.mxu0 0.0
  %2710 = vmatprep.subr.mxu0 0.0
  %2711 = vmatpush1.msra.mxu0 0.0
  %2712 = vmatprep.subr.mxu0 0.0
  %2713 = vmatpush1.msra.mxu0 %v1644
  %2714 = vmatprep.subr.mxu0 0.0
  %2715 = vmatpush1.msra.mxu0 %v1639
  %2716 = vmatprep.subr.mxu0 0.0
  %2717 = vmatpush2.msra.mxu0 0.0
  %2718 = vmatprep.subr.mxu0 0.0
  %2719 = vmatpush2.msra.mxu0 0.0
  %2720 = vmatprep.subr.mxu0 0.0
  %2721 = vmatpush2.msra.mxu0 0.0
  %2722 = vmatprep.subr.mxu0 0.0
  %2723 = vmatpush2.msra.mxu0 0.0
  %2724 = vmatprep.subr.mxu0 0.0
  %2725 = vmatpush2.msra.mxu0 0.0
  %2726 = vmatprep.subr.mxu0 0.0
  %2727 = vmatpush2.msra.mxu0 0.0
  %2728 = vmatprep.subr.mxu0 0.0
  %2729 = vmatpush2.msra.mxu0 0.0
  %2730 = vmatprep.subr.mxu0 0.0
  %2731 = vmatpush2.msra.mxu0 0.0
  %2732 = vmatprep.subr.mxu0 0.0
  %2733 = vmatpush2.msra.mxu0 0.0
  %2734 = vmatprep.subr.mxu0 0.0
  %2735 = vmatpush2.msra.mxu0 0.0
  %2736 = vmatprep.subr.mxu0 0.0
  %2737 = vmatpush2.msra.mxu0 0.0
  %2738 = vmatprep.subr.mxu0 0.0
  %2739 = vmatpush2.msra.mxu0 0.0
  %2740 = vmatprep.subr.mxu0 0.0
  %2741 = vmatpush2.msra.mxu0 0.0
  %2742 = vmatprep.subr.mxu0 0.0
  %2743 = vmatpush2.msra.mxu0 0.0
  %2744 = vmatprep.subr.mxu0 0.0
  %2745 = vmatpush2.msra.mxu0 0.0
  %2746 = vmatprep.subr.mxu0 0.0
  %2747 = vmatpush2.msra.mxu0 0.0
  %2748 = vmatprep.mubr.f32.mxu0 0.0
  %2749 = vmatmul.mubr.f32.gmra.mxu0 %v2679
  %v2750 = vpop.f32.mrf.mxu0
  %v2751 = vadd.f32 0.0, %v2750
  %v2752 = vpop.f32.mrf.mxu0
  %2753 = vmatprep.mubr.f32.mxu0 0.0
  %2754 = vmatmul.mubr.f32.gmra.mxu0 %v2682
  %v2755 = vpop.f32.mrf.mxu0
  %v2756 = vadd.f32 0.0, %v2755
  %v2757 = vpop.f32.mrf.mxu0
  %2758 = vdwg.mxu0
  %v2760 = vsel %vm1064, %v2593, 0
  %v2763 = vsel %vm1064, %v2594, 0
  %2765 = vmatprep.subr.mxu0 0.0
  %2766 = vmatpush1.msra.mxu0 0.0
  %2767 = vmatprep.subr.mxu0 0.0
  %2768 = vmatpush1.msra.mxu0 0.0
  %2769 = vmatprep.subr.mxu0 0.0
  %2770 = vmatpush1.msra.mxu0 0.0
  %2771 = vmatprep.subr.mxu0 0.0
  %2772 = vmatpush1.msra.mxu0 0.0
  %2773 = vmatprep.subr.mxu0 0.0
  %2774 = vmatpush1.msra.mxu0 0.0
  %2775 = vmatprep.subr.mxu0 0.0
  %2776 = vmatpush1.msra.mxu0 0.0
  %2777 = vmatprep.subr.mxu0 0.0
  %2778 = vmatpush1.msra.mxu0 0.0
  %2779 = vmatprep.subr.mxu0 0.0
  %2780 = vmatpush1.msra.mxu0 0.0
  %2781 = vmatprep.subr.mxu0 0.0
  %2782 = vmatpush1.msra.mxu0 0.0
  %2783 = vmatprep.subr.mxu0 0.0
  %2784 = vmatpush1.msra.mxu0 0.0
  %2785 = vmatprep.subr.mxu0 0.0
  %2786 = vmatpush1.msra.mxu0 0.0
  %2787 = vmatprep.subr.mxu0 0.0
  %2788 = vmatpush1.msra.mxu0 0.0
  %2789 = vmatprep.subr.mxu0 0.0
  %2790 = vmatpush1.msra.mxu0 0.0
  %2791 = vmatprep.subr.mxu0 0.0
  %2792 = vmatpush1.msra.mxu0 0.0
  %2793 = vmatprep.subr.mxu0 0.0
  %2794 = vmatpush1.msra.mxu0 %v1725
  %2795 = vmatprep.subr.mxu0 0.0
  %2796 = vmatpush1.msra.mxu0 %v1720
  %2797 = vmatprep.subr.mxu0 0.0
  %2798 = vmatpush2.msra.mxu0 0.0
  %2799 = vmatprep.subr.mxu0 0.0
  %2800 = vmatpush2.msra.mxu0 0.0
  %2801 = vmatprep.subr.mxu0 0.0
  %2802 = vmatpush2.msra.mxu0 0.0
  %2803 = vmatprep.subr.mxu0 0.0
  %2804 = vmatpush2.msra.mxu0 0.0
  %2805 = vmatprep.subr.mxu0 0.0
  %2806 = vmatpush2.msra.mxu0 0.0
  %2807 = vmatprep.subr.mxu0 0.0
  %2808 = vmatpush2.msra.mxu0 0.0
  %2809 = vmatprep.subr.mxu0 0.0
  %2810 = vmatpush2.msra.mxu0 0.0
  %2811 = vmatprep.subr.mxu0 0.0
  %2812 = vmatpush2.msra.mxu0 0.0
  %2813 = vmatprep.subr.mxu0 0.0
  %2814 = vmatpush2.msra.mxu0 0.0
  %2815 = vmatprep.subr.mxu0 0.0
  %2816 = vmatpush2.msra.mxu0 0.0
  %2817 = vmatprep.subr.mxu0 0.0
  %2818 = vmatpush2.msra.mxu0 0.0
  %2819 = vmatprep.subr.mxu0 0.0
  %2820 = vmatpush2.msra.mxu0 0.0
  %2821 = vmatprep.subr.mxu0 0.0
  %2822 = vmatpush2.msra.mxu0 0.0
  %2823 = vmatprep.subr.mxu0 0.0
  %2824 = vmatpush2.msra.mxu0 0.0
  %2825 = vmatprep.subr.mxu0 0.0
  %2826 = vmatpush2.msra.mxu0 0.0
  %2827 = vmatprep.subr.mxu0 0.0
  %2828 = vmatpush2.msra.mxu0 0.0
  %2829 = vmatprep.mubr.f32.mxu0 0.0
  %2830 = vmatmul.mubr.f32.gmra.mxu0 %v2760
  %v2831 = vpop.f32.mrf.mxu0
  %v2832 = vadd.f32 0.0, %v2831
  %v2833 = vpop.f32.mrf.mxu0
  %2834 = vmatprep.mubr.f32.mxu0 0.0
  %2835 = vmatmul.mubr.f32.gmra.mxu0 %v2763
  %v2836 = vpop.f32.mrf.mxu0
  %v2837 = vadd.f32 0.0, %v2836
  %v2838 = vpop.f32.mrf.mxu0
  %2839 = vdwg.mxu0
  %v2841 = vsel %vm1064, %v2595, 0
  %v2844 = vsel %vm1064, %v2596, 0
  %2846 = vmatprep.subr.mxu0 0.0
  %2847 = vmatpush1.msra.mxu0 0.0
  %2848 = vmatprep.subr.mxu0 0.0
  %2849 = vmatpush1.msra.mxu0 0.0
  %2850 = vmatprep.subr.mxu0 0.0
  %2851 = vmatpush1.msra.mxu0 0.0
  %2852 = vmatprep.subr.mxu0 0.0
  %2853 = vmatpush1.msra.mxu0 0.0
  %2854 = vmatprep.subr.mxu0 0.0
  %2855 = vmatpush1.msra.mxu0 0.0
  %2856 = vmatprep.subr.mxu0 0.0
  %2857 = vmatpush1.msra.mxu0 0.0
  %2858 = vmatprep.subr.mxu0 0.0
  %2859 = vmatpush1.msra.mxu0 0.0
  %2860 = vmatprep.subr.mxu0 0.0
  %2861 = vmatpush1.msra.mxu0 0.0
  %2862 = vmatprep.subr.mxu0 0.0
  %2863 = vmatpush1.msra.mxu0 0.0
  %2864 = vmatprep.subr.mxu0 0.0
  %2865 = vmatpush1.msra.mxu0 0.0
  %2866 = vmatprep.subr.mxu0 0.0
  %2867 = vmatpush1.msra.mxu0 0.0
  %2868 = vmatprep.subr.mxu0 0.0
  %2869 = vmatpush1.msra.mxu0 0.0
  %2870 = vmatprep.subr.mxu0 0.0
  %2871 = vmatpush1.msra.mxu0 0.0
  %2872 = vmatprep.subr.mxu0 0.0
  %2873 = vmatpush1.msra.mxu0 0.0
  %2874 = vmatprep.subr.mxu0 0.0
  %2875 = vmatpush1.msra.mxu0 %v1806
  %2876 = vmatprep.subr.mxu0 0.0
  %2877 = vmatpush1.msra.mxu0 %v1801
  %2878 = vmatprep.subr.mxu0 0.0
  %2879 = vmatpush2.msra.mxu0 0.0
  %2880 = vmatprep.subr.mxu0 0.0
  %2881 = vmatpush2.msra.mxu0 0.0
  %2882 = vmatprep.subr.mxu0 0.0
  %2883 = vmatpush2.msra.mxu0 0.0
  %2884 = vmatprep.subr.mxu0 0.0
  %2885 = vmatpush2.msra.mxu0 0.0
  %2886 = vmatprep.subr.mxu0 0.0
  %2887 = vmatpush2.msra.mxu0 0.0
  %2888 = vmatprep.subr.mxu0 0.0
  %2889 = vmatpush2.msra.mxu0 0.0
  %2890 = vmatprep.subr.mxu0 0.0
  %2891 = vmatpush2.msra.mxu0 0.0
  %2892 = vmatprep.subr.mxu0 0.0
  %2893 = vmatpush2.msra.mxu0 0.0
  %2894 = vmatprep.subr.mxu0 0.0
  %2895 = vmatpush2.msra.mxu0 0.0
  %2896 = vmatprep.subr.mxu0 0.0
  %2897 = vmatpush2.msra.mxu0 0.0
  %2898 = vmatprep.subr.mxu0 0.0
  %2899 = vmatpush2.msra.mxu0 0.0
  %2900 = vmatprep.subr.mxu0 0.0
  %2901 = vmatpush2.msra.mxu0 0.0
  %2902 = vmatprep.subr.mxu0 0.0
  %2903 = vmatpush2.msra.mxu0 0.0
  %2904 = vmatprep.subr.mxu0 0.0
  %2905 = vmatpush2.msra.mxu0 0.0
  %2906 = vmatprep.subr.mxu0 0.0
  %2907 = vmatpush2.msra.mxu0 0.0
  %2908 = vmatprep.subr.mxu0 0.0
  %2909 = vmatpush2.msra.mxu0 0.0
  %2910 = vmatprep.mubr.f32.mxu0 0.0
  %2911 = vmatmul.mubr.f32.gmra.mxu0 %v2841
  %v2912 = vpop.f32.mrf.mxu0
  %v2913 = vadd.f32 0.0, %v2912
  %v2914 = vpop.f32.mrf.mxu0
  %2915 = vmatprep.mubr.f32.mxu0 0.0
  %2916 = vmatmul.mubr.f32.gmra.mxu0 %v2844
  %v2917 = vpop.f32.mrf.mxu0
  %v2918 = vadd.f32 0.0, %v2917
  %v2919 = vpop.f32.mrf.mxu0
  %2920 = vdwg.mxu0
  %v2921 = vxor.u32 %v2670, 2147483648
  %v2922 = vxor.u32 %v2675, 2147483648
  %v2923 = vxor.u32 %v2751, 2147483648
  %v2924 = vxor.u32 %v2756, 2147483648
  %v2925 = vxor.u32 %v2832, 2147483648
  %v2926 = vxor.u32 %v2837, 2147483648
  %v2927 = vxor.u32 %v2913, 2147483648
  %v2928 = vxor.u32 %v2918, 2147483648
  %v2929 = vmul.f32 %v2921, 1.442695
  %v2930 = vpow.pop %v2929
  %v2931 = vmul.f32 %v2922, 1.442695
  %v2932 = vpow.pop %v2931
  %v2933 = vmul.f32 %v2923, 1.442695
  %v2934 = vpow.pop %v2933
  %v2935 = vmul.f32 %v2924, 1.442695
  %v2936 = vpow.pop %v2935
  %v2937 = vmul.f32 %v2925, 1.442695
  %v2938 = vpow.pop %v2937
  %v2939 = vmul.f32 %v2926, 1.442695
  %v2940 = vpow.pop %v2939
  %v2941 = vmul.f32 %v2927, 1.442695
  %v2942 = vpow.pop %v2941
  %v2943 = vmul.f32 %v2928, 1.442695
  %v2944 = vpow.pop %v2943
  %v2945 = vadd.f32 %v2930, 1.0
  %v2946 = vadd.f32 %v2932, 1.0
  %v2947 = vadd.f32 %v2934, 1.0
  %v2948 = vadd.f32 %v2936, 1.0
  %v2949 = vadd.f32 %v2938, 1.0
  %v2950 = vadd.f32 %v2940, 1.0
  %v2951 = vadd.f32 %v2942, 1.0
  %v2952 = vadd.f32 %v2944, 1.0
  %v2953 = vrcp.pop %v2945
  %v2954 = vmul.f32 1.0, %v2953
  %v2955 = vrcp.pop %v2946
  %v2956 = vmul.f32 1.0, %v2955
  %v2957 = vrcp.pop %v2947
  %v2958 = vmul.f32 1.0, %v2957
  %v2959 = vrcp.pop %v2948
  %v2960 = vmul.f32 1.0, %v2959
  %v2961 = vrcp.pop %v2949
  %v2962 = vmul.f32 1.0, %v2961
  %v2963 = vrcp.pop %v2950
  %v2964 = vmul.f32 1.0, %v2963
  %v2965 = vrcp.pop %v2951
  %v2966 = vmul.f32 1.0, %v2965
  %v2967 = vrcp.pop %v2952
  %v2968 = vmul.f32 1.0, %v2967
  %2969 = vst.msk [vmem:[%s3] sm:$0xff] %vm359, %v2954
  %2970 = vst.msk [vmem:[%s3 + $0x8] sm:$0xff] %vm359, %v2956
  %2971 = vst.msk [vmem:[%s3 + $0x10] sm:$0xff] %vm359, %v2958
  %2972 = vst.msk [vmem:[%s3 + $0x18] sm:$0xff] %vm359, %v2960
  %2973 = vst.msk [vmem:[%s3 + $0x20] sm:$0xff] %vm359, %v2962
  %2974 = vst.msk [vmem:[%s3 + $0x28] sm:$0xff] %vm359, %v2964
  %2975 = vst.msk [vmem:[%s3 + $0x30] sm:$0xff] %vm359, %v2966
  %2976 = vst.msk [vmem:[%s3 + $0x38] sm:$0xff] %vm359, %v2968
  // Predicated region
  $region14: #{tpu_custom_call.1} parent=0 // pred_check
    _
  $region15: #{tpu_custom_call.1} parent=0 // pred_check_branch
    %2978 = sbr.rel (0) target = $region17
  $region16: #{tpu_custom_call.1} parent=0 // pred_region
    _
  $region17: #{tpu_custom_call.1} parent=0 // pred_fallthru
    _
  // Predicated region
  $region18: #{tpu_custom_call.1} parent=0 // pred_check
    _
  $region19: #{tpu_custom_call.1} parent=0 // pred_check_branch
    %2980 = sbr.rel (0) target = $region21
  $region20: #{tpu_custom_call.1} parent=0 // pred_region
    _
  $region21: #{tpu_custom_call.1} parent=0 // pred_fallthru
    _

</llo_original>
